<compile_context>
chip_gen: v7x
topology: tpu7x:2x2x1
jax: 0.10.0
libtpu: 0.0.40
codegen_flags: <defaults>
</compile_context>

<pallas_src>
import functools
from typing import NamedTuple

import jax
import jax.numpy as jnp
from jax.experimental import pallas as pl
from jax.experimental.pallas import tpu as pltpu


def _round_up(v: int, m: int) -> int:
    return ((v + m - 1) // m) * m


# ---------------------------------------------------------------------------
# Basis generation (trace time helper shared by the kernel paths).
# ---------------------------------------------------------------------------
def _basis_terms(x, degree):
    """Yield the nontrivial Pentanacci basis terms of x, in weight-slab order.

    P0=0 / P1=1 are kept as Python scalars (never materialized); P2==P3==x is
    merged into a single weight slab at prep time, so only one `x` term is
    emitted here.  Recurrence: P_n = x*P_{n-1} + P_{n-2} + P_{n-3} + P_{n-4}
    + P_{n-5}  (n >= 5), computed with a rolling 5-deep window.
    """
    if degree < 2:
        return
    yield x                                   # merged n=2,3 slab
    if degree < 4:
        return
    x2 = x * x
    yield x2                                  # n=4
    window = [0.0, 1.0, x, x, x2]             # [P_{n-5} .. P_{n-1}]
    for _ in range(5, degree + 1):
        p = x * window[4]
        for term in window[:4]:
            if isinstance(term, float):
                if term != 0.0:
                    p = p + term
            else:
                p = p + term
        yield p
        window = window[1:] + [p]


# ---------------------------------------------------------------------------
# Kernel.
# ---------------------------------------------------------------------------
def penta_kan_kernel(x_ref, w_ref, b_ref, o_ref, *, degree, i_pad, num_terms,
                     compute_dtype, per_slab):
    """x_ref: (TB, I_pad); w_ref: (T*I_pad, TO); b_ref: (1, TO); o_ref: (TB, TO)."""
    if num_terms == 0:                        # degree <= 1: output is just the bias
        o_ref[...] = jnp.broadcast_to(
            b_ref[...].astype(jnp.float32), o_ref.shape).astype(o_ref.dtype)
        return

    x = jax.nn.sigmoid(x_ref[...].astype(jnp.float32))

    if per_slab:
        # Large I: accumulate per-slab dots; only the recurrence window and the
        # f32 accumulator stay live (no full-basis materialization / spills).
        acc = None
        for t, term in enumerate(_basis_terms(x, degree)):
            w_slab = w_ref[t * i_pad:(t + 1) * i_pad, :].astype(compute_dtype)
            d = jnp.dot(term.astype(compute_dtype), w_slab,
                        preferred_element_type=jnp.float32)
            acc = d if acc is None else acc + d
        y = acc
    else:
        # Small I: stack the 128-aligned terms -> one MXU matmul with larger K.
        terms = list(_basis_terms(x, degree))
        basis = terms[0] if len(terms) == 1 else jnp.concatenate(terms, axis=-1)
        y = jnp.dot(basis.astype(compute_dtype), w_ref[...].astype(compute_dtype),
                    preferred_element_type=jnp.float32)

    y = y + b_ref[...].astype(jnp.float32)
    o_ref[...] = y.astype(o_ref.dtype)


# ---------------------------------------------------------------------------
# Parameter preparation (once per parameter update).
# ---------------------------------------------------------------------------
class PentaKANParams(NamedTuple):
    w_stacked: jax.Array    # (num_terms * i_pad, o_pad)  (dummy if num_terms == 0)
    bias: jax.Array         # (1, o_pad), float32
    degree: int
    input_dim: int
    output_dim: int
    i_pad: int
    num_terms: int


def prepare_pentanacci_params(coeffs, *, param_dtype=jnp.bfloat16,
                              lane_multiple=128):
    """Fold/stack (I, O, degree+1) coefficients once into the kernel layout."""
    input_dim, output_dim, num_coeffs = coeffs.shape
    degree = num_coeffs - 1
    i_pad = _round_up(input_dim, lane_multiple)
    o_pad = _round_up(output_dim, lane_multiple)
    c = coeffs.astype(jnp.float32)

    if degree >= 1:                                       # ones-term -> bias
        bias = jnp.sum(c[:, :, 1], axis=0)
    else:
        bias = jnp.zeros((output_dim,), jnp.float32)
    bias = jnp.pad(bias, (0, o_pad - output_dim)).reshape(1, o_pad)   # f32

    slabs = []
    if degree >= 2:
        w_x = c[:, :, 2]
        if degree >= 3:
            w_x = w_x + c[:, :, 3]                        # P2 == P3 == x
        slabs.append(w_x)
    if degree >= 4:
        slabs.append(c[:, :, 4])                          # x^2
    for n in range(5, degree + 1):
        slabs.append(c[:, :, n])
    num_terms = len(slabs)

    pad = ((0, i_pad - input_dim), (0, o_pad - output_dim))
    if slabs:
        w = jnp.concatenate([jnp.pad(s, pad) for s in slabs], axis=0)
    else:
        w = jnp.zeros((i_pad, o_pad), jnp.float32)        # dummy, never read
    w = w.astype(param_dtype)
    return PentaKANParams(w, bias, degree, input_dim, output_dim, i_pad, num_terms)


# ---------------------------------------------------------------------------
# Forward wrapper.
# ---------------------------------------------------------------------------
_SINGLE_BUFFER_SUPPORTED = True   # flipped off if this JAX rejects pl.Buffered(1)


def _block_spec(shape, index_map, *, single_buffer=False):
    if single_buffer and hasattr(pl, "Buffered"):
        try:
            return pl.BlockSpec(shape, index_map, pipeline_mode=pl.Buffered(1))
        except TypeError:
            pass
    return pl.BlockSpec(shape, index_map)


def pentanacci_kan_apply(x, params, *, compute_dtype=None, max_tile_b=512,
                         weight_vmem_budget=12 << 20, tile_vmem_budget=24 << 20,
                         single_buffer_resident=True):
    """x: (batch, input_dim) -> (batch, output_dim)."""
    global _SINGLE_BUFFER_SUPPORTED

    batch, input_dim = x.shape
    assert input_dim == params.input_dim, (input_dim, params.input_dim)
    w, bias = params.w_stacked, params.bias
    k_dim, o_pad = w.shape
    i_pad, num_terms, degree = params.i_pad, params.num_terms, params.degree
    if compute_dtype is None:
        compute_dtype = w.dtype
    out_dtype = x.dtype

    x_item = jnp.dtype(x.dtype).itemsize
    w_item = jnp.dtype(w.dtype).itemsize
    o_item = jnp.dtype(out_dtype).itemsize

    # Large-I path: accumulate per slab instead of materializing the basis.
    per_slab = num_terms >= 2 and i_pad >= 256

    # ---- Output tiling: keep (one copy of) the weight within the VMEM budget
    # (v7x only has 64 MiB per TensorCore). ----
    tile_o = o_pad
    if k_dim * o_pad * w_item > weight_vmem_budget:
        tile_o = 128
        for cand in range(o_pad - 128, 127, -128):
            if o_pad % cand == 0 and k_dim * cand * w_item <= weight_vmem_budget:
                tile_o = cand
                break
    grid_o = o_pad // tile_o

    # ---- Batch tiling: equalized tiles (waste < 8 rows per tile), >= 2 grid
    # steps when batch >= 16 so v7x's two TensorCores both get work. ----
    b8 = _round_up(batch, 8)
    basis_cols = min(num_terms, 6) if per_slab else max(num_terms, 1)
    row_bytes = (2 * i_pad * x_item + 2 * tile_o * o_item
                 + basis_cols * i_pad * 4 + tile_o * 4)
    tile_cap = max(8, min(max_tile_b, (tile_vmem_budget // row_bytes) // 8 * 8))
    grid_b = pl.cdiv(b8, tile_cap)
    if b8 >= 16:
        grid_b = max(grid_b, 2)
    tile_b = _round_up(pl.cdiv(b8, grid_b), 8)
    padded_b = tile_b * grid_b

    x_p = x
    if padded_b != batch or i_pad != input_dim:
        x_p = jnp.pad(x, ((0, padded_b - batch), (0, i_pad - input_dim)))

    resident = grid_o == 1
    use_single_buffer = (single_buffer_resident and resident
                         and _SINGLE_BUFFER_SUPPORTED)

    kernel = functools.partial(
        penta_kan_kernel, degree=degree, i_pad=i_pad, num_terms=num_terms,
        compute_dtype=compute_dtype, per_slab=per_slab)

    # VMEM actually used (double-buffered x/out tiles, single weight copy when
    # resident, f32 working set) + headroom; capped below v7x's 64 MiB.
    vmem_bytes = (2 * tile_b * i_pad * x_item
                  + (1 if use_single_buffer else 2) * k_dim * tile_o * w_item
                  + 2 * tile_o * 4
                  + 2 * tile_b * tile_o * o_item
                  + tile_b * basis_cols * i_pad * 4
                  + tile_b * tile_o * 4)
    vmem_limit = int(min(60 << 20, max(32 << 20, vmem_bytes * 5 // 4 + (4 << 20))))

    flops = 2 * padded_b * k_dim * o_pad if num_terms else padded_b * o_pad
    cost = pl.CostEstimate(
        flops=int(flops),
        transcendentals=int(padded_b * i_pad),            # sigmoid
        bytes_accessed=int(x_p.size * x_item + w.size * w_item
                           + bias.size * 4 + padded_b * o_pad * o_item),
    )

    call = pl.pallas_call(
        kernel,
        out_shape=jax.ShapeDtypeStruct((padded_b, o_pad), out_dtype),
        grid_spec=pltpu.PrefetchScalarGridSpec(
            num_scalar_prefetch=0,
            grid=(grid_b, grid_o),
            in_specs=[
                pl.BlockSpec((tile_b, i_pad), lambda b, j: (b, 0)),
                _block_spec((k_dim, tile_o), lambda b, j: (0, j),
                            single_buffer=use_single_buffer),
                _block_spec((1, tile_o), lambda b, j: (0, j),
                            single_buffer=use_single_buffer),
            ],
            out_specs=pl.BlockSpec((tile_b, tile_o), lambda b, j: (b, j)),
        ),
        compiler_params=pltpu.CompilerParams(
            dimension_semantics=("parallel", "arbitrary"),
            vmem_limit_bytes=vmem_limit,
        ),
        cost_estimate=cost,
    )

    try:
        out = call(x_p, w, bias)
    except Exception:
        if not use_single_buffer:
            raise
        # This JAX build rejected single-buffered resident blocks; retry with
        # the default double-buffered pipeline (identical results).
        _SINGLE_BUFFER_SUPPORTED = False
        return pentanacci_kan_apply(
            x, params, compute_dtype=compute_dtype, max_tile_b=max_tile_b,
            weight_vmem_budget=weight_vmem_budget,
            tile_vmem_budget=tile_vmem_budget, single_buffer_resident=False)

    return out[:batch, :params.output_dim]


def pentanacci_kan_layer(x, coeffs, *, param_dtype=jnp.bfloat16,
                         compute_dtype=None):
    """One-shot convenience wrapper (prep + apply)."""
    params = prepare_pentanacci_params(coeffs, param_dtype=param_dtype)
    return pentanacci_kan_apply(x, params, compute_dtype=compute_dtype)


# ---------------------------------------------------------------------------
# Pure-JAX reference mirroring the PyTorch forward exactly.
# ---------------------------------------------------------------------------
def _reference(x, coeffs):
    degree = coeffs.shape[-1] - 1
    s = jax.nn.sigmoid(x)
    terms = []
    for n in range(degree + 1):
        if n == 0:
            terms.append(jnp.zeros_like(s))
        elif n in (1, 2):
            terms.append(s ** (n - 1))
        elif n in (3, 4):
            terms.append(s ** (n - 2))
        else:
            terms.append(s * terms[n - 1] + terms[n - 2] + terms[n - 3]
                         + terms[n - 4] + terms[n - 5])
    basis = jnp.stack(terms, axis=-1)                     # (b, i, d+1)
    return jnp.einsum("bid,iod->bo", basis, coeffs)


if __name__ == "__main__":
    def run_case(batch, input_dim, output_dim, degree, param_dtype, atol, rtol,
                 seed):
        kx, kw = jax.random.split(jax.random.fold_in(jax.random.PRNGKey(0), seed))
        x = jax.random.normal(kx, (batch, input_dim), dtype=jnp.float32)
        std = 1.0 / (input_dim * (degree + 1))            # matches nn.init.normal_
        coeffs = std * jax.random.normal(
            kw, (input_dim, output_dim, degree + 1), dtype=jnp.float32)

        params = prepare_pentanacci_params(coeffs, param_dtype=param_dtype)
        y = jax.block_until_ready(pentanacci_kan_apply(x, params))
        y_ref = _reference(x, coeffs)

        assert y.shape == (batch, output_dim), y.shape
        err = float(jnp.max(jnp.abs(y - y_ref)))
        assert bool(jnp.allclose(y, y_ref, atol=atol, rtol=rtol)), (
            batch, input_dim, output_dim, degree, str(param_dtype), err)

    # Default fast path: bf16 weights, I=16 padded to 128, O=32 padded to 128,
    # batch=20 -> two 16-row grid steps (both v7x TensorCores busy).
    run_case(20, 16, 32, 7, jnp.bfloat16, atol=2e-2, rtol=2e-2, seed=0)
    # Same layer with f32 weights: strict numerical check of the kernel math.
    run_case(20, 16, 32, 7, jnp.float32, atol=1e-5, rtol=1e-5, seed=1)
    # input_dim padded to 256 exercises the per-slab accumulation path.
    run_case(16, 200, 32, 6, jnp.float32, atol=1e-5, rtol=1e-5, seed=2)
    # degree=1: bias-only path (no matmul).
    run_case(8, 16, 32, 1, jnp.float32, atol=1e-6, rtol=1e-6, seed=3)

    print("KERNEL_OK")
</pallas_src>

<mosaic_0001>
module attributes {stable_mosaic.version = 11 : i64} {
  func.func @penta_kan_kernel(%arg0: i32, %arg1: i32, %arg2: memref<16x128xf32, #tpu.memory_space<vmem>>, %arg3: memref<640x128xbf16, #tpu.memory_space<vmem>>, %arg4: memref<1x128xf32, #tpu.memory_space<vmem>>, %arg5: memref<16x128xf32, #tpu.memory_space<vmem>>) attributes {dimension_semantics = [#tpu.dimension_semantics<parallel>, #tpu.dimension_semantics<arbitrary>], iteration_bounds = array<i64: 2, 1>, scalar_prefetch = 0 : i64, scratch_operands = 0 : i64, tpu.core_type = #tpu.core_type<tc>, window_params = [{transform_indices = @transform_0, window_bounds = array<i64: 16, 128>}, {pipeline_mode = #tpu.pipeline_mode<synchronous>, transform_indices = @transform_1, window_bounds = array<i64: 640, 128>}, {pipeline_mode = #tpu.pipeline_mode<synchronous>, transform_indices = @transform_2, window_bounds = array<i64: 1, 128>}, {transform_indices = @transform_3, window_bounds = array<i64: 16, 128>}]} {
    %c0 = arith.constant 0 : index
    %c0_0 = arith.constant 0 : index
    %0 = vector.load %arg2[%c0, %c0_0] : memref<16x128xf32, #tpu.memory_space<vmem>>, vector<16x128xf32>
    %1 = arith.negf %0 : vector<16x128xf32>
    %2 = math.exp %1 : vector<16x128xf32>
    %cst = arith.constant 1.000000e+00 : f32
    %3 = vector.broadcast %cst : f32 to vector<16x128xf32>
    %4 = arith.addf %3, %2 : vector<16x128xf32>
    %5 = arith.divf %3, %4 : vector<16x128xf32>
    %6 = arith.mulf %5, %5 : vector<16x128xf32>
    %7 = arith.mulf %5, %6 : vector<16x128xf32>
    %cst_1 = arith.constant 1.000000e+00 : f32
    %8 = vector.broadcast %cst_1 : f32 to vector<16x128xf32>
    %9 = arith.addf %7, %8 : vector<16x128xf32>
    %10 = arith.addf %9, %5 : vector<16x128xf32>
    %11 = arith.addf %10, %5 : vector<16x128xf32>
    %12 = arith.mulf %5, %11 : vector<16x128xf32>
    %cst_2 = arith.constant 1.000000e+00 : f32
    %13 = vector.broadcast %cst_2 : f32 to vector<16x128xf32>
    %14 = arith.addf %12, %13 : vector<16x128xf32>
    %15 = arith.addf %14, %5 : vector<16x128xf32>
    %16 = arith.addf %15, %5 : vector<16x128xf32>
    %17 = arith.addf %16, %6 : vector<16x128xf32>
    %18 = arith.mulf %5, %17 : vector<16x128xf32>
    %19 = arith.addf %18, %5 : vector<16x128xf32>
    %20 = arith.addf %19, %5 : vector<16x128xf32>
    %21 = arith.addf %20, %6 : vector<16x128xf32>
    %22 = arith.addf %21, %11 : vector<16x128xf32>
    %23 = tpu.concatenate %5, %6, %11, %17, %22 in 1 : vector<16x128xf32>, vector<16x128xf32>, vector<16x128xf32>, vector<16x128xf32>, vector<16x128xf32> -> vector<16x640xf32>
    %24 = arith.truncf %23 : vector<16x640xf32> to vector<16x640xbf16>
    %c0_3 = arith.constant 0 : index
    %c0_4 = arith.constant 0 : index
    %25 = vector.load %arg3[%c0_3, %c0_4] : memref<640x128xbf16, #tpu.memory_space<vmem>>, vector<640x128xbf16>
    %cst_5 = arith.constant dense<0.000000e+00> : vector<16x128xf32>
    %26 = tpu.matmul %24, %25, %cst_5 {dimension_numbers = #tpu.dot_dimension_numbers<[1], [0], [0], [1], [0, 0, 1, 1], [], []>} : vector<16x640xbf16>, vector<640x128xbf16>, vector<16x128xf32> -> vector<16x128xf32>
    %c0_6 = arith.constant 0 : index
    %c0_7 = arith.constant 0 : index
    %27 = vector.load %arg4[%c0_6, %c0_7] : memref<1x128xf32, #tpu.memory_space<vmem>>, vector<1x128xf32>
    %28 = vector.broadcast %27 : vector<1x128xf32> to vector<16x128xf32>
    %29 = arith.addf %26, %28 : vector<16x128xf32>
    %c0_8 = arith.constant 0 : index
    %c0_9 = arith.constant 0 : index
    %30 = vector.load %arg5[%c0_8, %c0_9] : memref<16x128xf32, #tpu.memory_space<vmem>>, vector<16x128xf32>
    tpu.vector_store %arg5[%c0_8, %c0_9], %29 {strides = array<i32>} : memref<16x128xf32, #tpu.memory_space<vmem>>, vector<16x128xf32>,
    return
  }
  func.func @transform_0(%arg0: i32, %arg1: i32) -> (i32, i32) {
    %c0_i32 = arith.constant 0 : i32
    %c0_i32_0 = arith.constant 0 : i32
    return %arg0, %c0_i32 : i32, i32
  }
  func.func @transform_1(%arg0: i32, %arg1: i32) -> (i32, i32) {
    %c0_i32 = arith.constant 0 : i32
    %c0_i32_0 = arith.constant 0 : i32
    return %c0_i32, %arg1 : i32, i32
  }
  func.func @transform_2(%arg0: i32, %arg1: i32) -> (i32, i32) {
    %c0_i32 = arith.constant 0 : i32
    %c0_i32_0 = arith.constant 0 : i32
    return %c0_i32, %arg1 : i32, i32
  }
  func.func @transform_3(%arg0: i32, %arg1: i32) -> (i32, i32) {
    %c0_i32 = arith.constant 0 : i32
    return %arg0, %arg1 : i32, i32
  }
}

module attributes {stable_mosaic.version = 11 : i64} {
  func.func @penta_kan_kernel(%arg0: i32, %arg1: i32, %arg2: memref<16x128xf32, #tpu.memory_space<vmem>>, %arg3: memref<640x128xbf16, #tpu.memory_space<vmem>>, %arg4: memref<1x128xf32, #tpu.memory_space<vmem>>, %arg5: memref<16x128xf32, #tpu.memory_space<vmem>>) attributes {dimension_semantics = [#tpu.dimension_semantics<parallel>, #tpu.dimension_semantics<arbitrary>], iteration_bounds = array<i64: 2, 1>, scalar_prefetch = 0 : i64, scratch_operands = 0 : i64, tpu.core_type = #tpu.core_type<tc>, window_params = [{transform_indices = @transform_0, window_bounds = array<i64: 16, 128>}, {transform_indices = @transform_1, window_bounds = array<i64: 640, 128>}, {transform_indices = @transform_2, window_bounds = array<i64: 1, 128>}, {transform_indices = @transform_3, window_bounds = array<i64: 16, 128>}]} {
    %c0 = arith.constant 0 : index
    %c0_0 = arith.constant 0 : index
    %0 = vector.load %arg2[%c0, %c0_0] : memref<16x128xf32, #tpu.memory_space<vmem>>, vector<16x128xf32>
    %1 = arith.negf %0 : vector<16x128xf32>
    %2 = math.exp %1 : vector<16x128xf32>
    %cst = arith.constant 1.000000e+00 : f32
    %3 = vector.broadcast %cst : f32 to vector<16x128xf32>
    %4 = arith.addf %3, %2 : vector<16x128xf32>
    %5 = arith.divf %3, %4 : vector<16x128xf32>
    %6 = arith.mulf %5, %5 : vector<16x128xf32>
    %7 = arith.mulf %5, %6 : vector<16x128xf32>
    %cst_1 = arith.constant 1.000000e+00 : f32
    %8 = vector.broadcast %cst_1 : f32 to vector<16x128xf32>
    %9 = arith.addf %7, %8 : vector<16x128xf32>
    %10 = arith.addf %9, %5 : vector<16x128xf32>
    %11 = arith.addf %10, %5 : vector<16x128xf32>
    %12 = arith.mulf %5, %11 : vector<16x128xf32>
    %cst_2 = arith.constant 1.000000e+00 : f32
    %13 = vector.broadcast %cst_2 : f32 to vector<16x128xf32>
    %14 = arith.addf %12, %13 : vector<16x128xf32>
    %15 = arith.addf %14, %5 : vector<16x128xf32>
    %16 = arith.addf %15, %5 : vector<16x128xf32>
    %17 = arith.addf %16, %6 : vector<16x128xf32>
    %18 = arith.mulf %5, %17 : vector<16x128xf32>
    %19 = arith.addf %18, %5 : vector<16x128xf32>
    %20 = arith.addf %19, %5 : vector<16x128xf32>
    %21 = arith.addf %20, %6 : vector<16x128xf32>
    %22 = arith.addf %21, %11 : vector<16x128xf32>
    %23 = tpu.concatenate %5, %6, %11, %17, %22 in 1 : vector<16x128xf32>, vector<16x128xf32>, vector<16x128xf32>, vector<16x128xf32>, vector<16x128xf32> -> vector<16x640xf32>
    %24 = arith.truncf %23 : vector<16x640xf32> to vector<16x640xbf16>
    %c0_3 = arith.constant 0 : index
    %c0_4 = arith.constant 0 : index
    %25 = vector.load %arg3[%c0_3, %c0_4] : memref<640x128xbf16, #tpu.memory_space<vmem>>, vector<640x128xbf16>
    %cst_5 = arith.constant dense<0.000000e+00> : vector<16x128xf32>
    %26 = tpu.matmul %24, %25, %cst_5 {dimension_numbers = #tpu.dot_dimension_numbers<[1], [0], [0], [1], [0, 0, 1, 1], [], []>} : vector<16x640xbf16>, vector<640x128xbf16>, vector<16x128xf32> -> vector<16x128xf32>
    %c0_6 = arith.constant 0 : index
    %c0_7 = arith.constant 0 : index
    %27 = vector.load %arg4[%c0_6, %c0_7] : memref<1x128xf32, #tpu.memory_space<vmem>>, vector<1x128xf32>
    %28 = vector.broadcast %27 : vector<1x128xf32> to vector<16x128xf32>
    %29 = arith.addf %26, %28 : vector<16x128xf32>
    %c0_8 = arith.constant 0 : index
    %c0_9 = arith.constant 0 : index
    %30 = vector.load %arg5[%c0_8, %c0_9] : memref<16x128xf32, #tpu.memory_space<vmem>>, vector<16x128xf32>
    tpu.vector_store %arg5[%c0_8, %c0_9], %29 {strides = array<i32>} : memref<16x128xf32, #tpu.memory_space<vmem>>, vector<16x128xf32>,
    return
  }
  func.func @transform_0(%arg0: i32, %arg1: i32) -> (i32, i32) {
    %c0_i32 = arith.constant 0 : i32
    %c0_i32_0 = arith.constant 0 : i32
    return %arg0, %c0_i32 : i32, i32
  }
  func.func @transform_1(%arg0: i32, %arg1: i32) -> (i32, i32) {
    %c0_i32 = arith.constant 0 : i32
    %c0_i32_0 = arith.constant 0 : i32
    return %c0_i32, %arg1 : i32, i32
  }
  func.func @transform_2(%arg0: i32, %arg1: i32) -> (i32, i32) {
    %c0_i32 = arith.constant 0 : i32
    %c0_i32_0 = arith.constant 0 : i32
    return %c0_i32, %arg1 : i32, i32
  }
  func.func @transform_3(%arg0: i32, %arg1: i32) -> (i32, i32) {
    %c0_i32 = arith.constant 0 : i32
    return %arg0, %arg1 : i32, i32
  }
}

</mosaic_0001>

<llo_original>
// kernel: tpu_custom_call.1
$region0: #{tpu_custom_call.1}
  #allocation0 [shape = 'u32[]', space=smem, size = 0x4, offset = 0x4, fixed_abs, tag = 'smem constant byte address 0x4 - core index']
  #allocation1 [shape = 'u32[144,128]{1,0:T(1,128)}', space=vmem, size = 0x12000, scoped, tag = 'internal scratch']
  %s0 = inlined_call_operand.hbm [shape: f32[32,128], index: 0, kind: input, shape index: {}]
  %s1 = inlined_call_operand.hbm [shape: bf16[640,128], index: 1, kind: input, shape index: {}]
  %s2 = inlined_call_operand.vmem [shape: f32[1,128], index: 2, kind: input, shape index: {}]
  %s3 = inlined_call_operand.hbm [shape: f32[32,128], index: 3, kind: output, shape index: {}]
  %s4 = sld [smem:[#allocation0]]
  $region53: #{tpu_custom_call.1} parent=0
    _
  %s6 = ssub.s32 1, %s4
  %s7 = scalar_select 0, %s6, %s4
  $region1: #{tpu_custom_call.1} parent=0
    #allocation2 [shape = 'u8[16384]{0}', space=vmem, size = 0x4000, scoped, tag = 'input window, operand 0']
    #allocation3 [shape = 's32[2]{0}', space=sflag, size = 0x8, scoped, tag = 'scoped memory for tpu_custom_call.1']
    #allocation4 [shape = 's32[2]{0}', space=sflag, size = 0x8, scoped, tag = 'scoped memory for tpu_custom_call.1']
    #allocation5 [shape = 'u8[163840]{0}', space=vmem, size = 0x28000, scoped, tag = 'input window, operand 1, single buffered']
    #allocation6 [shape = 's32[1]{0}', space=sflag, size = 0x4, scoped, tag = 'scoped memory for tpu_custom_call.1']
    #allocation7 [shape = 'u8[16384]{0}', space=vmem, size = 0x4000, scoped, tag = 'output window, operand 0']
    %8 = vsyncpa [#allocation3], 0
    %s9 = scalar_lea.sflag [#allocation3], 1
    %10 = vsyncpa %s9, 0
    %11 = vsyncpa [#allocation6], 0
    %12 = vsyncpa [#allocation4], 0
    %s13 = scalar_lea.sflag [#allocation4], 1
    %14 = vsyncpa %s13, 0
    loop: start=0, step=1, limit=4
    $region2: #{tpu_custom_call.1} parent=1 // loop_pre_header
      _
    $region3: #{tpu_custom_call.1} parent=1 // loop_header
      %s16 = sphi 0, %s20
      %p17 = scmp.ge.s32.totalorder %s16, 4
      %s23 = sphi 0, %s35
      %s24 = sphi 0, %s31
      %s25 = sphi 0, %s23
      %s26 = sphi 0, %s24
      %s27 = sphi 0, %s25
      %s28 = sphi 0, %s26
      %s38 = sphi 0, %s40
      %s41 = sphi 0, %s38
      %s42 = sphi 0, %s41
      %s58 = sphi 0, %s42
      %s64 = sphi 0, %s66
      %s67 = sphi 0, %s64
      %s68 = sphi 0, %s67
      %s84 = sphi 0, %s68
      %s90 = sphi 0, %s92
      %s93 = sphi 0, %s90
      %s94 = sphi 0, %s93
      %s110 = sphi 0, %s94
      %s118 = sphi 0, %s120
      %s121 = sphi 0, %s118
      %s122 = sphi 0, %s121
      %s138 = sphi 0, %s122
    $region4: #{tpu_custom_call.1} parent=1 // loop_header_branch
      %19 = sbr.rel (%p17) target = $region8
    $region5: #{tpu_custom_call.1} parent=1 // loop_body
      %s21 = ssub.s32 %s16, 1
      %s22 = ssub.s32 %s16, 2
      %s29 = sadd.s32 1, %s24
      %p30 = scmp.ge.s32.totalorder %s29, 1
      %s31 = scalar_select %p30, 0, %s29
      %s32 = sadd.s32 1, %s23
      %s33 = scalar_select %p30, %s32, %s23
      %p34 = scmp.ge.s32.totalorder %s33, 2
      %s35 = scalar_select %p34, 0, %s33
      %s36 = ssub.s32 %s23, %s35
      %p37 = scmp.eq.s32.totalorder %s36, 0
      %s39 = sadd.s32 %s38, 1
      %s40 = scalar_select %p37, %s38, %s39
      %p43 = pneg %p37
      %p44 = scmp.eq.s32.totalorder %s16, 1
      %p45 = por %p43, %p44
      %p46 = scmp.ne.s32.totalorder %s38, %s41
      %p47 = scmp.eq.s32.totalorder %s16, 0
      %p48 = por %p46, %p47
      %p49 = scmp.ne.s32.totalorder %s38, %s41
      %p50 = scmp.eq.s32.totalorder %s21, 1
      %p51 = por %p49, %p50
      %p52 = scmp.ne.s32.totalorder %s41, %s42
      %p53 = scmp.eq.s32.totalorder %s21, 0
      %p54 = por %p52, %p53
      %p55 = scmp.ne.s32.totalorder %s41, %s42
      %p56 = scmp.eq.s32.totalorder %s22, 1
      %p57 = por %p55, %p56
      %p59 = scmp.ne.s32.totalorder %s42, %s58
      %p60 = scmp.eq.s32.totalorder %s22, 0
      %p61 = por %p59, %p60
      %s62 = ssub.s32 %s24, %s31
      %p63 = scmp.eq.s32.totalorder %s62, 0
      %s65 = sadd.s32 %s64, 1
      %s66 = scalar_select %p63, %s64, %s65
      %p69 = pneg %p63
      %p70 = scmp.eq.s32.totalorder %s16, 1
      %p71 = por %p69, %p70
      %p72 = scmp.ne.s32.totalorder %s64, %s67
      %p73 = scmp.eq.s32.totalorder %s16, 0
      %p74 = por %p72, %p73
      %p75 = scmp.ne.s32.totalorder %s64, %s67
      %p76 = scmp.eq.s32.totalorder %s21, 1
      %p77 = por %p75, %p76
      %p78 = scmp.ne.s32.totalorder %s67, %s68
      %p79 = scmp.eq.s32.totalorder %s21, 0
      %p80 = por %p78, %p79
      %p81 = scmp.ne.s32.totalorder %s67, %s68
      %p82 = scmp.eq.s32.totalorder %s22, 1
      %p83 = por %p81, %p82
      %p85 = scmp.ne.s32.totalorder %s68, %s84
      %p86 = scmp.eq.s32.totalorder %s22, 0
      %p87 = por %p85, %p86
      %s88 = ssub.s32 %s24, %s31
      %p89 = scmp.eq.s32.totalorder %s88, 0
      %s91 = sadd.s32 %s90, 1
      %s92 = scalar_select %p89, %s90, %s91
      %p95 = pneg %p89
      %p96 = scmp.eq.s32.totalorder %s16, 1
      %p97 = por %p95, %p96
      %p98 = scmp.ne.s32.totalorder %s90, %s93
      %p99 = scmp.eq.s32.totalorder %s16, 0
      %p100 = por %p98, %p99
      %p101 = scmp.ne.s32.totalorder %s90, %s93
      %p102 = scmp.eq.s32.totalorder %s21, 1
      %p103 = por %p101, %p102
      %p104 = scmp.ne.s32.totalorder %s93, %s94
      %p105 = scmp.eq.s32.totalorder %s21, 0
      %p106 = por %p104, %p105
      %p107 = scmp.ne.s32.totalorder %s93, %s94
      %p108 = scmp.eq.s32.totalorder %s22, 1
      %p109 = por %p107, %p108
      %p111 = scmp.ne.s32.totalorder %s94, %s110
      %p112 = scmp.eq.s32.totalorder %s22, 0
      %p113 = por %p111, %p112
      %s114 = ssub.s32 %s23, %s35
      %s115 = ssub.s32 %s24, %s31
      %s116 = sor.u32 %s114, %s115
      %p117 = scmp.eq.s32.totalorder %s116, 0
      %s119 = sadd.s32 %s118, 1
      %s120 = scalar_select %p117, %s118, %s119
      %p123 = pneg %p117
      %p124 = scmp.eq.s32.totalorder %s16, 1
      %p125 = por %p123, %p124
      %p126 = scmp.ne.s32.totalorder %s118, %s121
      %p127 = scmp.eq.s32.totalorder %s16, 0
      %p128 = por %p126, %p127
      %p129 = scmp.ne.s32.totalorder %s118, %s121
      %p130 = scmp.eq.s32.totalorder %s21, 1
      %p131 = por %p129, %p130
      %p132 = scmp.ne.s32.totalorder %s121, %s122
      %p133 = scmp.eq.s32.totalorder %s21, 0
      %p134 = por %p132, %p133
      %p135 = scmp.ne.s32.totalorder %s121, %s122
      %p136 = scmp.eq.s32.totalorder %s22, 1
      %p137 = por %p135, %p136
      %p139 = scmp.ne.s32.totalorder %s122, %s138
      %p140 = scmp.eq.s32.totalorder %s22, 0
      %p141 = por %p139, %p140
      %p142 = scmp.le.s32.totalorder 1, %s16
      %p143 = scmp.lt.s32.totalorder %s16, 3
      %p144 = pnand %p142, %p143
      %p145 = pneg %p144
      // Predicated region
      $region9: #{tpu_custom_call.1} parent=5 // pred_check
        _
      $region10: #{tpu_custom_call.1} parent=5 // pred_check_branch
        %147 = sbr.rel (%p144) target = $region12
      $region11: #{tpu_custom_call.1} parent=5 // pred_region
        %s148 = ssub.s32 %s16, 1
        // Predicated region
        $region13: #{tpu_custom_call.1} parent=11 // pred_check
          %p149 = pneg %p80
        $region14: #{tpu_custom_call.1} parent=11 // pred_check_branch
          %151 = sbr.rel (%p149) target = $region16
        $region15: #{tpu_custom_call.1} parent=11 // pred_region
          %s153 = ssub.s32 5120, 5120
          %154 = vsyncadd [#allocation6], %s153
          %s155 = smul.addr %s26, 64
          %s156 = scalar_lea.hbm %s1, %s155
          %s157 = sshll.u32 [#allocation5], 4
          %s158 = int_to_ptr.vmem [resolvable:$true] %s157
          %163 = dma.hbm_to_vmem [thread:$0]  %s156, 5120, %s158, [#allocation6], 64, 64, 4
        $region16: #{tpu_custom_call.1} parent=11 // pred_fallthru
          _
        // Predicated region
        $region17: #{tpu_custom_call.1} parent=11 // pred_check
          %p164 = pneg %p106
        $region18: #{tpu_custom_call.1} parent=11 // pred_check_branch
          %166 = sbr.rel (%p164) target = $region20
        $region19: #{tpu_custom_call.1} parent=11 // pred_region
          %p167 = scmp.lt.s32.totalorder %s26, 0
          %s168 = scalar_select %p167, %s26, 0
          %s169 = scalar_lea.vmem %s2, %s168
        $region20: #{tpu_custom_call.1} parent=11 // pred_fallthru
          _
      $region12: #{tpu_custom_call.1} parent=5 // pred_fallthru
        _
      %p170 = scmp.lt.s32.totalorder %s16, 2
      // Predicated region
      $region21: #{tpu_custom_call.1} parent=5 // pred_check
        %p171 = pneg %p170
      $region22: #{tpu_custom_call.1} parent=5 // pred_check_branch
        %173 = sbr.rel (%p171) target = $region24
      $region23: #{tpu_custom_call.1} parent=5 // pred_region
        // Predicated region
        $region25: #{tpu_custom_call.1} parent=23 // pred_check
          %p174 = pneg %p48
        $region26: #{tpu_custom_call.1} parent=23 // pred_check_branch
          %176 = sbr.rel (%p174) target = $region28
        $region27: #{tpu_custom_call.1} parent=23 // pred_region
          %s177 = sand.u32 %s38, 1
          %s178 = scalar_lea.sflag [#allocation3], %s177
          %s179 = sand.u32 %s38, 1
          %s180 = smul.addr %s179, 16
          %s181 = scalar_lea.vmem [#allocation2], %s180
          %s182 = smul.u32 2, %s23
          %s184 = ssub.s32 256, 256
          %185 = vsyncadd %s178, %s184
          %s186 = smul.addr %s182, 128
          %s187 = scalar_lea.hbm %s0, %s186
          %s188 = sshll.u32 %s181, 4
          %s189 = int_to_ptr.vmem [resolvable:$true] %s188
          %194 = dma.hbm_to_vmem [thread:$0]  %s187, 256, %s189, %s178, 128, 128, 8
        $region28: #{tpu_custom_call.1} parent=23 // pred_fallthru
          _
      $region24: #{tpu_custom_call.1} parent=5 // pred_fallthru
        _
      %p195 = scmp.le.s32.totalorder 1, %s16
      %p196 = scmp.lt.s32.totalorder %s16, 3
      %p197 = pnand %p195, %p196
      %p198 = pneg %p197
      // Predicated region
      $region29: #{tpu_custom_call.1} parent=5 // pred_check
        _
      $region30: #{tpu_custom_call.1} parent=5 // pred_check_branch
        %200 = sbr.rel (%p197) target = $region32
      $region31: #{tpu_custom_call.1} parent=5 // pred_region
        %s201 = ssub.s32 %s16, 1
        %s202 = sand.u32 %s41, 1
        %s203 = scalar_lea.sflag [#allocation3], %s202
        %s204 = sand.u32 %s41, 1
        %s205 = smul.addr %s204, 16
        %s206 = scalar_lea.vmem [#allocation2], %s205
        // Predicated region
        $region33: #{tpu_custom_call.1} parent=31 // pred_check
          %p207 = pneg %p54
        $region34: #{tpu_custom_call.1} parent=31 // pred_check_branch
          %209 = sbr.rel (%p207) target = $region36
        $region35: #{tpu_custom_call.1} parent=31 // pred_region
          %210 = dma.done %s203, 256
        $region36: #{tpu_custom_call.1} parent=31 // pred_fallthru
          _
        // Predicated region
        $region37: #{tpu_custom_call.1} parent=31 // pred_check
          %p211 = pneg %p80
        $region38: #{tpu_custom_call.1} parent=31 // pred_check_branch
          %213 = sbr.rel (%p211) target = $region40
        $region39: #{tpu_custom_call.1} parent=31 // pred_region
          %214 = dma.done [#allocation6], 5120
        $region40: #{tpu_custom_call.1} parent=31 // pred_fallthru
          _
        %s215 = sand.u32 %s41, 1
        %s216 = scalar_lea.sflag [#allocation3], %s215
        %s217 = sand.u32 %s41, 1
        %s218 = smul.addr %s217, 16
        %s219 = scalar_lea.vmem [#allocation2], %s218
        %p220 = pneg %p54
        %p221 = pneg %p51
        %p222 = pneg %p80
        %p223 = pneg %p77
        %p224 = scmp.lt.s32.totalorder %s26, 0
        %s225 = scalar_select %p224, %s26, 0
        %s226 = scalar_lea.vmem %s2, %s225
        %p227 = pneg %p106
        %p228 = pneg %p103
        %p229 = pneg %p134
        %p230 = pneg %p131
        %s231 = sand.u32 %s121, 1
        %s232 = scalar_lea.sflag [#allocation4], %s231
        %s233 = sand.u32 %s121, 1
        %s234 = smul.addr %s233, 16
        %s235 = scalar_lea.vmem [#allocation7], %s234
        %s236 = smul.u32 2, %s25
        %p237 = scmp.lt.s32.totalorder %s26, 0
        %s238 = scalar_select %p237, %s26, 0
        %s239 = scalar_lea.vmem %s2, %s238
        %s240 = smul.u32 2, %s25
        %v242 = vld [vmem:[%s206] sm:$0xff]
        %v243 = vld [vmem:[%s206 + $0x8] sm:$0xff]
        %v244 = vxor.u32 %v242, 2147483648
        %v245 = vxor.u32 %v243, 2147483648
        %v246 = vmul.f32 %v244, 1.442695
        %v247 = vpow.pop %v246
        %v248 = vmul.f32 %v245, 1.442695
        %v249 = vpow.pop %v248
        %v250 = vadd.f32 %v247, 1.0
        %v251 = vadd.f32 %v249, 1.0
        %v252 = vrcp.pop %v250
        %v253 = vmul.f32 1.0, %v252
        %v254 = vrcp.pop %v251
        %v255 = vmul.f32 1.0, %v254
        %v256 = vmul.f32 %v253, %v253
        %v257 = vmul.f32 %v255, %v255
        %v258 = vmul.f32 %v253, %v256
        %v259 = vmul.f32 %v255, %v257
        %v260 = vadd.f32 %v258, 1.0
        %v261 = vadd.f32 %v259, 1.0
        %v262 = vadd.f32 %v260, %v253
        %v263 = vadd.f32 %v261, %v255
        %v264 = vadd.f32 %v262, %v253
        %v265 = vadd.f32 %v263, %v255
        %v266 = vmul.f32 %v253, %v264
        %v267 = vmul.f32 %v255, %v265
        %v268 = vadd.f32 %v266, 1.0
        %v269 = vadd.f32 %v267, 1.0
        %v270 = vadd.f32 %v268, %v253
        %v271 = vadd.f32 %v269, %v255
        %v272 = vadd.f32 %v270, %v253
        %v273 = vadd.f32 %v271, %v255
        %v274 = vadd.f32 %v272, %v256
        %v275 = vadd.f32 %v273, %v257
        %v276 = vmul.f32 %v253, %v274
        %v277 = vmul.f32 %v255, %v275
        %v278 = vadd.f32 %v276, %v253
        %v279 = vadd.f32 %v277, %v255
        %v280 = vadd.f32 %v278, %v253
        %v281 = vadd.f32 %v279, %v255
        %v282 = vadd.f32 %v280, %v256
        %v283 = vadd.f32 %v281, %v257
        %v284 = vadd.f32 %v282, %v264
        %v285 = vadd.f32 %v283, %v265
        %v286 = vpack.c.bf16 %v255, %v253
        %v287 = vpack.c.bf16 %v257, %v256
        %v288 = vpack.c.bf16 %v265, %v264
        %v289 = vpack.c.bf16 %v275, %v274
        %v290 = vpack.c.bf16 %v285, %v284
        %v291 = vld [vmem:[#allocation5] sm:$0xf]
        %v292 = vld [vmem:[#allocation5 + $0x4] sm:$0xf]
        %v293 = vld [vmem:[#allocation5 + $0x8] sm:$0xf]
        %v294 = vld [vmem:[#allocation5 + $0xc] sm:$0xf]
        %v295 = vld [vmem:[#allocation5 + $0x10] sm:$0xf]
        %v296 = vld [vmem:[#allocation5 + $0x14] sm:$0xf]
        %v297 = vld [vmem:[#allocation5 + $0x18] sm:$0xf]
        %v298 = vld [vmem:[#allocation5 + $0x1c] sm:$0xf]
        %v299 = vld [vmem:[#allocation5 + $0x20] sm:$0xf]
        %v300 = vld [vmem:[#allocation5 + $0x24] sm:$0xf]
        %v301 = vld [vmem:[#allocation5 + $0x28] sm:$0xf]
        %v302 = vld [vmem:[#allocation5 + $0x2c] sm:$0xf]
        %v303 = vld [vmem:[#allocation5 + $0x30] sm:$0xf]
        %v304 = vld [vmem:[#allocation5 + $0x34] sm:$0xf]
        %v305 = vld [vmem:[#allocation5 + $0x38] sm:$0xf]
        %v306 = vld [vmem:[#allocation5 + $0x3c] sm:$0xf]
        %v307 = vld [vmem:[#allocation5 + $0x40] sm:$0xf]
        %v308 = vld [vmem:[#allocation5 + $0x44] sm:$0xf]
        %v309 = vld [vmem:[#allocation5 + $0x48] sm:$0xf]
        %v310 = vld [vmem:[#allocation5 + $0x4c] sm:$0xf]
        %v311 = vld [vmem:[#allocation5 + $0x50] sm:$0xf]
        %v312 = vld [vmem:[#allocation5 + $0x54] sm:$0xf]
        %v313 = vld [vmem:[#allocation5 + $0x58] sm:$0xf]
        %v314 = vld [vmem:[#allocation5 + $0x5c] sm:$0xf]
        %v315 = vld [vmem:[#allocation5 + $0x60] sm:$0xf]
        %v316 = vld [vmem:[#allocation5 + $0x64] sm:$0xf]
        %v317 = vld [vmem:[#allocation5 + $0x68] sm:$0xf]
        %v318 = vld [vmem:[#allocation5 + $0x6c] sm:$0xf]
        %v319 = vld [vmem:[#allocation5 + $0x70] sm:$0xf]
        %v320 = vld [vmem:[#allocation5 + $0x74] sm:$0xf]
        %v321 = vld [vmem:[#allocation5 + $0x78] sm:$0xf]
        %v322 = vld [vmem:[#allocation5 + $0x7c] sm:$0xf]
        %v323 = vld [vmem:[#allocation5 + $0x80] sm:$0xf]
        %v324 = vld [vmem:[#allocation5 + $0x84] sm:$0xf]
        %v325 = vld [vmem:[#allocation5 + $0x88] sm:$0xf]
        %v326 = vld [vmem:[#allocation5 + $0x8c] sm:$0xf]
        %v327 = vld [vmem:[#allocation5 + $0x90] sm:$0xf]
        %v328 = vld [vmem:[#allocation5 + $0x94] sm:$0xf]
        %v329 = vld [vmem:[#allocation5 + $0x98] sm:$0xf]
        %v330 = vld [vmem:[#allocation5 + $0x9c] sm:$0xf]
        %v331 = vld [vmem:[#allocation5 + $0xa0] sm:$0xf]
        %v332 = vld [vmem:[#allocation5 + $0xa4] sm:$0xf]
        %v333 = vld [vmem:[#allocation5 + $0xa8] sm:$0xf]
        %v334 = vld [vmem:[#allocation5 + $0xac] sm:$0xf]
        %v335 = vld [vmem:[#allocation5 + $0xb0] sm:$0xf]
        %v336 = vld [vmem:[#allocation5 + $0xb4] sm:$0xf]
        %v337 = vld [vmem:[#allocation5 + $0xb8] sm:$0xf]
        %v338 = vld [vmem:[#allocation5 + $0xbc] sm:$0xf]
        %v339 = vld [vmem:[#allocation5 + $0xc0] sm:$0xf]
        %v340 = vld [vmem:[#allocation5 + $0xc4] sm:$0xf]
        %v341 = vld [vmem:[#allocation5 + $0xc8] sm:$0xf]
        %v342 = vld [vmem:[#allocation5 + $0xcc] sm:$0xf]
        %v343 = vld [vmem:[#allocation5 + $0xd0] sm:$0xf]
        %v344 = vld [vmem:[#allocation5 + $0xd4] sm:$0xf]
        %v345 = vld [vmem:[#allocation5 + $0xd8] sm:$0xf]
        %v346 = vld [vmem:[#allocation5 + $0xdc] sm:$0xf]
        %v347 = vld [vmem:[#allocation5 + $0xe0] sm:$0xf]
        %v348 = vld [vmem:[#allocation5 + $0xe4] sm:$0xf]
        %v349 = vld [vmem:[#allocation5 + $0xe8] sm:$0xf]
        %v350 = vld [vmem:[#allocation5 + $0xec] sm:$0xf]
        %v351 = vld [vmem:[#allocation5 + $0xf0] sm:$0xf]
        %v352 = vld [vmem:[#allocation5 + $0xf4] sm:$0xf]
        %v353 = vld [vmem:[#allocation5 + $0xf8] sm:$0xf]
        %v354 = vld [vmem:[#allocation5 + $0xfc] sm:$0xf]
        %v355 = vld [vmem:[#allocation5 + $0x100] sm:$0xf]
        %v356 = vld [vmem:[#allocation5 + $0x104] sm:$0xf]
        %v357 = vld [vmem:[#allocation5 + $0x108] sm:$0xf]
        %v358 = vld [vmem:[#allocation5 + $0x10c] sm:$0xf]
        %v359 = vld [vmem:[#allocation5 + $0x110] sm:$0xf]
        %v360 = vld [vmem:[#allocation5 + $0x114] sm:$0xf]
        %v361 = vld [vmem:[#allocation5 + $0x118] sm:$0xf]
        %v362 = vld [vmem:[#allocation5 + $0x11c] sm:$0xf]
        %v363 = vld [vmem:[#allocation5 + $0x120] sm:$0xf]
        %v364 = vld [vmem:[#allocation5 + $0x124] sm:$0xf]
        %v365 = vld [vmem:[#allocation5 + $0x128] sm:$0xf]
        %v366 = vld [vmem:[#allocation5 + $0x12c] sm:$0xf]
        %v367 = vld [vmem:[#allocation5 + $0x130] sm:$0xf]
        %v368 = vld [vmem:[#allocation5 + $0x134] sm:$0xf]
        %v369 = vld [vmem:[#allocation5 + $0x138] sm:$0xf]
        %v370 = vld [vmem:[#allocation5 + $0x13c] sm:$0xf]
        %v371 = vld [vmem:[%s239] sm:$0x1]
        %v373 = vlaneseq
        %v374 = vshrl.u32 %v373, 7
        %v375 = vsub.s32 0, %v374
        %v376 = vrot.slane %v371, %v375
        %v458 = vunpack.c.l.b16 %v291
        %v459 = vunpack.c.l.b16 %v292
        %v460 = vunpack.c.l.b16 %v293
        %v461 = vunpack.c.l.b16 %v294
        %v462 = vunpack.c.l.b16 %v295
        %v463 = vunpack.c.l.b16 %v296
        %v464 = vunpack.c.l.b16 %v297
        %v465 = vunpack.c.l.b16 %v298
        %v466 = vunpack.c.l.b16 %v299
        %v467 = vunpack.c.l.b16 %v300
        %v468 = vunpack.c.l.b16 %v301
        %v469 = vunpack.c.l.b16 %v302
        %v470 = vunpack.c.l.b16 %v303
        %v471 = vunpack.c.l.b16 %v304
        %v472 = vunpack.c.l.b16 %v305
        %v473 = vunpack.c.l.b16 %v306
        %v474 = vunpack.c.l.b16 %v307
        %v475 = vunpack.c.l.b16 %v308
        %v476 = vunpack.c.l.b16 %v309
        %v477 = vunpack.c.l.b16 %v310
        %v478 = vunpack.c.l.b16 %v311
        %v479 = vunpack.c.l.b16 %v312
        %v480 = vunpack.c.l.b16 %v313
        %v481 = vunpack.c.l.b16 %v314
        %v482 = vunpack.c.l.b16 %v315
        %v483 = vunpack.c.l.b16 %v316
        %v484 = vunpack.c.l.b16 %v317
        %v485 = vunpack.c.l.b16 %v318
        %v486 = vunpack.c.l.b16 %v319
        %v487 = vunpack.c.l.b16 %v320
        %v488 = vunpack.c.l.b16 %v321
        %v489 = vunpack.c.l.b16 %v322
        %v490 = vunpack.c.l.b16 %v323
        %v491 = vunpack.c.l.b16 %v324
        %v492 = vunpack.c.l.b16 %v325
        %v493 = vunpack.c.l.b16 %v326
        %v494 = vunpack.c.l.b16 %v327
        %v495 = vunpack.c.l.b16 %v328
        %v496 = vunpack.c.l.b16 %v329
        %v497 = vunpack.c.l.b16 %v330
        %v498 = vunpack.c.l.b16 %v331
        %v499 = vunpack.c.l.b16 %v332
        %v500 = vunpack.c.l.b16 %v333
        %v501 = vunpack.c.l.b16 %v334
        %v502 = vunpack.c.l.b16 %v335
        %v503 = vunpack.c.l.b16 %v336
        %v504 = vunpack.c.l.b16 %v337
        %v505 = vunpack.c.l.b16 %v338
        %v506 = vunpack.c.l.b16 %v339
        %v507 = vunpack.c.l.b16 %v340
        %v508 = vunpack.c.l.b16 %v341
        %v509 = vunpack.c.l.b16 %v342
        %v510 = vunpack.c.l.b16 %v343
        %v511 = vunpack.c.l.b16 %v344
        %v512 = vunpack.c.l.b16 %v345
        %v513 = vunpack.c.l.b16 %v346
        %v514 = vunpack.c.l.b16 %v347
        %v515 = vunpack.c.l.b16 %v348
        %v516 = vunpack.c.l.b16 %v349
        %v517 = vunpack.c.l.b16 %v350
        %v518 = vunpack.c.l.b16 %v351
        %v519 = vunpack.c.l.b16 %v352
        %v520 = vunpack.c.l.b16 %v353
        %v521 = vunpack.c.l.b16 %v354
        %v522 = vunpack.c.l.b16 %v355
        %v523 = vunpack.c.l.b16 %v356
        %v524 = vunpack.c.l.b16 %v357
        %v525 = vunpack.c.l.b16 %v358
        %v526 = vunpack.c.l.b16 %v359
        %v527 = vunpack.c.l.b16 %v360
        %v528 = vunpack.c.l.b16 %v361
        %v529 = vunpack.c.l.b16 %v362
        %v530 = vunpack.c.l.b16 %v363
        %v531 = vunpack.c.l.b16 %v364
        %v532 = vunpack.c.l.b16 %v365
        %v533 = vunpack.c.l.b16 %v366
        %v534 = vunpack.c.l.b16 %v367
        %v535 = vunpack.c.l.b16 %v368
        %v536 = vunpack.c.l.b16 %v369
        %v537 = vunpack.c.l.b16 %v370
        %v538 = vpack.c.b16 %v459, %v458
        %v539 = vpack.c.b16 %v461, %v460
        %v540 = vpack.c.b16 %v463, %v462
        %v541 = vpack.c.b16 %v465, %v464
        %v542 = vpack.c.b16 %v467, %v466
        %v543 = vpack.c.b16 %v469, %v468
        %v544 = vpack.c.b16 %v471, %v470
        %v545 = vpack.c.b16 %v473, %v472
        %v546 = vpack.c.b16 %v475, %v474
        %v547 = vpack.c.b16 %v477, %v476
        %v548 = vpack.c.b16 %v479, %v478
        %v549 = vpack.c.b16 %v481, %v480
        %v550 = vpack.c.b16 %v483, %v482
        %v551 = vpack.c.b16 %v485, %v484
        %v552 = vpack.c.b16 %v487, %v486
        %v553 = vpack.c.b16 %v489, %v488
        %v554 = vpack.c.b16 %v491, %v490
        %v555 = vpack.c.b16 %v493, %v492
        %v556 = vpack.c.b16 %v495, %v494
        %v557 = vpack.c.b16 %v497, %v496
        %v558 = vpack.c.b16 %v499, %v498
        %v559 = vpack.c.b16 %v501, %v500
        %v560 = vpack.c.b16 %v503, %v502
        %v561 = vpack.c.b16 %v505, %v504
        %v562 = vpack.c.b16 %v507, %v506
        %v563 = vpack.c.b16 %v509, %v508
        %v564 = vpack.c.b16 %v511, %v510
        %v565 = vpack.c.b16 %v513, %v512
        %v566 = vpack.c.b16 %v515, %v514
        %v567 = vpack.c.b16 %v517, %v516
        %v568 = vpack.c.b16 %v519, %v518
        %v569 = vpack.c.b16 %v521, %v520
        %v570 = vpack.c.b16 %v523, %v522
        %v571 = vpack.c.b16 %v525, %v524
        %v572 = vpack.c.b16 %v527, %v526
        %v573 = vpack.c.b16 %v529, %v528
        %v574 = vpack.c.b16 %v531, %v530
        %v575 = vpack.c.b16 %v533, %v532
        %v576 = vpack.c.b16 %v535, %v534
        %v577 = vpack.c.b16 %v537, %v536
        %618 = vmatprep.subr.bf16.mxu0 0
        %619 = vmatpush1.bf16.msra.mxu0 %v538
        %620 = vmatprep.subr.bf16.mxu0 0
        %621 = vmatpush1.bf16.msra.mxu0 %v539
        %622 = vmatprep.subr.bf16.mxu0 0
        %623 = vmatpush1.bf16.msra.mxu0 %v540
        %624 = vmatprep.subr.bf16.mxu0 0
        %625 = vmatpush1.bf16.msra.mxu0 %v541
        %626 = vmatprep.subr.bf16.mxu0 0
        %627 = vmatpush1.bf16.msra.mxu0 %v542
        %628 = vmatprep.subr.bf16.mxu0 0
        %629 = vmatpush1.bf16.msra.mxu0 %v543
        %630 = vmatprep.subr.bf16.mxu0 0
        %631 = vmatpush1.bf16.msra.mxu0 %v544
        %632 = vmatprep.subr.bf16.mxu0 0
        %633 = vmatpush1.bf16.msra.mxu0 %v545
        %634 = vmatprep.subr.bf16.mxu0 0
        %635 = vmatpush1.bf16.msra.mxu0 %v546
        %636 = vmatprep.subr.bf16.mxu0 0
        %637 = vmatpush1.bf16.msra.mxu0 %v547
        %638 = vmatprep.subr.bf16.mxu0 0
        %639 = vmatpush1.bf16.msra.mxu0 %v548
        %640 = vmatprep.subr.bf16.mxu0 0
        %641 = vmatpush1.bf16.msra.mxu0 %v549
        %642 = vmatprep.subr.bf16.mxu0 0
        %643 = vmatpush1.bf16.msra.mxu0 %v550
        %644 = vmatprep.subr.bf16.mxu0 0
        %645 = vmatpush1.bf16.msra.mxu0 %v551
        %646 = vmatprep.subr.bf16.mxu0 0
        %647 = vmatpush1.bf16.msra.mxu0 %v552
        %648 = vmatprep.subr.bf16.mxu0 0
        %649 = vmatpush1.bf16.msra.mxu0 %v553
        %650 = vmatprep.mubr.bf16.mxu0 %v287
        %651 = vmatmul.mubr.bf16.gmra.mrb[0].mxu0 %v286
        %v652 = vpop.f32.mrb[0].mxu0
        %v653 = vadd.f32 %v376, %v652
        %v654 = vpop.f32.mrb[0].mxu0
        %v655 = vpop.f32.mrb[0].mxu0
        %v656 = vadd.f32 %v376, %v655
        %v657 = vpop.f32.mrb[0].mxu0
        %658 = vdwg.mxu0
        %659 = vmatprep.subr.bf16.mxu0 0
        %660 = vmatpush1.bf16.msra.mxu0 %v554
        %661 = vmatprep.subr.bf16.mxu0 0
        %662 = vmatpush1.bf16.msra.mxu0 %v555
        %663 = vmatprep.subr.bf16.mxu0 0
        %664 = vmatpush1.bf16.msra.mxu0 %v556
        %665 = vmatprep.subr.bf16.mxu0 0
        %666 = vmatpush1.bf16.msra.mxu0 %v557
        %667 = vmatprep.subr.bf16.mxu0 0
        %668 = vmatpush1.bf16.msra.mxu0 %v558
        %669 = vmatprep.subr.bf16.mxu0 0
        %670 = vmatpush1.bf16.msra.mxu0 %v559
        %671 = vmatprep.subr.bf16.mxu0 0
        %672 = vmatpush1.bf16.msra.mxu0 %v560
        %673 = vmatprep.subr.bf16.mxu0 0
        %674 = vmatpush1.bf16.msra.mxu0 %v561
        %675 = vmatprep.subr.bf16.mxu0 0
        %676 = vmatpush1.bf16.msra.mxu0 %v562
        %677 = vmatprep.subr.bf16.mxu0 0
        %678 = vmatpush1.bf16.msra.mxu0 %v563
        %679 = vmatprep.subr.bf16.mxu0 0
        %680 = vmatpush1.bf16.msra.mxu0 %v564
        %681 = vmatprep.subr.bf16.mxu0 0
        %682 = vmatpush1.bf16.msra.mxu0 %v565
        %683 = vmatprep.subr.bf16.mxu0 0
        %684 = vmatpush1.bf16.msra.mxu0 %v566
        %685 = vmatprep.subr.bf16.mxu0 0
        %686 = vmatpush1.bf16.msra.mxu0 %v567
        %687 = vmatprep.subr.bf16.mxu0 0
        %688 = vmatpush1.bf16.msra.mxu0 %v568
        %689 = vmatprep.subr.bf16.mxu0 0
        %690 = vmatpush1.bf16.msra.mxu0 %v569
        %691 = vmatprep.mubr.bf16.mxu0 %v289
        %692 = vmatmul.mubr.bf16.gmra.mrb[0].mxu0 %v288
        %v693 = vpop.f32.mrb[0].mxu0
        %v694 = vadd.f32 %v653, %v693
        %v695 = vpop.f32.mrb[0].mxu0
        %v696 = vpop.f32.mrb[0].mxu0
        %v697 = vadd.f32 %v656, %v696
        %v698 = vpop.f32.mrb[0].mxu0
        %699 = vdwg.mxu0
        %700 = vmatprep.subr.bf16.mxu0 0
        %701 = vmatpush1.bf16.msra.mxu0 %v570
        %702 = vmatprep.subr.bf16.mxu0 0
        %703 = vmatpush1.bf16.msra.mxu0 %v571
        %704 = vmatprep.subr.bf16.mxu0 0
        %705 = vmatpush1.bf16.msra.mxu0 %v572
        %706 = vmatprep.subr.bf16.mxu0 0
        %707 = vmatpush1.bf16.msra.mxu0 %v573
        %708 = vmatprep.subr.bf16.mxu0 0
        %709 = vmatpush1.bf16.msra.mxu0 %v574
        %710 = vmatprep.subr.bf16.mxu0 0
        %711 = vmatpush1.bf16.msra.mxu0 %v575
        %712 = vmatprep.subr.bf16.mxu0 0
        %713 = vmatpush1.bf16.msra.mxu0 %v576
        %714 = vmatprep.subr.bf16.mxu0 0
        %715 = vmatpush1.bf16.msra.mxu0 %v577
        %716 = vmatprep.subr.bf16.mxu0 0
        %717 = vmatpush1.bf16.msra.mxu0 0
        %718 = vmatprep.subr.bf16.mxu0 0
        %719 = vmatpush1.bf16.msra.mxu0 0
        %720 = vmatprep.subr.bf16.mxu0 0
        %721 = vmatpush1.bf16.msra.mxu0 0
        %722 = vmatprep.subr.bf16.mxu0 0
        %723 = vmatpush1.bf16.msra.mxu0 0
        %724 = vmatprep.subr.bf16.mxu0 0
        %725 = vmatpush1.bf16.msra.mxu0 0
        %726 = vmatprep.subr.bf16.mxu0 0
        %727 = vmatpush1.bf16.msra.mxu0 0
        %728 = vmatprep.subr.bf16.mxu0 0
        %729 = vmatpush1.bf16.msra.mxu0 0
        %730 = vmatprep.subr.bf16.mxu0 0
        %731 = vmatpush1.bf16.msra.mxu0 0
        %732 = vmatprep.mubr.bf16.mxu0 0
        %733 = vmatmul.mubr.bf16.gmra.mrb[0].mxu0 %v290
        %v734 = vpop.f32.mrb[0].mxu0
        %v735 = vadd.f32 %v694, %v734
        %v736 = vpop.f32.mrb[0].mxu0
        %v737 = vpop.f32.mrb[0].mxu0
        %v738 = vadd.f32 %v697, %v737
        %v739 = vpop.f32.mrb[0].mxu0
        %740 = vdwg.mxu0
        %741 = vst [vmem:[%s235] sm:$0xff] %v735
        %742 = vst [vmem:[%s235 + $0x8] sm:$0xff] %v738
        %s743 = sand.u32 %s121, 1
        %s744 = scalar_lea.sflag [#allocation4], %s743
        %s745 = sand.u32 %s121, 1
        %s746 = smul.addr %s745, 16
        %s747 = scalar_lea.vmem [#allocation7], %s746
        // Predicated region
        $region41: #{tpu_custom_call.1} parent=31 // pred_check
          %p748 = pneg %p131
        $region42: #{tpu_custom_call.1} parent=31 // pred_check_branch
          %750 = sbr.rel (%p748) target = $region44
        $region43: #{tpu_custom_call.1} parent=31 // pred_region
          %s751 = smul.u32 2, %s25
          %s753 = ssub.s32 256, 256
          %754 = vsyncadd %s744, %s753
          %s755 = sadd.s32 %s26, %s751
          %s756 = smul.addr %s755, 128
          %s757 = scalar_lea.hbm %s3, %s756
          %s758 = sshll.u32 %s747, 4
          %s759 = int_to_ptr.vmem [resolvable:$true] %s758
          %764 = dma.vmem_to_hbm [thread:$0]  %s759, 256, %s757, %s744, 128, 128, 8
        $region44: #{tpu_custom_call.1} parent=31 // pred_fallthru
          _
      $region32: #{tpu_custom_call.1} parent=5 // pred_fallthru
        _
      %p765 = scmp.le.s32.totalorder 2, %s16
      // Predicated region
      $region45: #{tpu_custom_call.1} parent=5 // pred_check
        %p766 = pneg %p765
      $region46: #{tpu_custom_call.1} parent=5 // pred_check_branch
        %768 = sbr.rel (%p766) target = $region48
      $region47: #{tpu_custom_call.1} parent=5 // pred_region
        %s769 = ssub.s32 %s16, 2
        // Predicated region
        $region49: #{tpu_custom_call.1} parent=47 // pred_check
          %p770 = pneg %p137
        $region50: #{tpu_custom_call.1} parent=47 // pred_check_branch
          %772 = sbr.rel (%p770) target = $region52
        $region51: #{tpu_custom_call.1} parent=47 // pred_region
          %s773 = sand.u32 %s122, 1
          %s774 = scalar_lea.sflag [#allocation4], %s773
          %s775 = sand.u32 %s122, 1
          %s776 = smul.addr %s775, 16
          %s777 = scalar_lea.vmem [#allocation7], %s776
          %778 = dma.done %s774, 256
        $region52: #{tpu_custom_call.1} parent=47 // pred_fallthru
          _
      $region48: #{tpu_custom_call.1} parent=5 // pred_fallthru
        _
    $region6: #{tpu_custom_call.1} parent=1 // loop_footer
      %s20 = sadd.s32 1, %s16
    $region7: #{tpu_custom_call.1} parent=1 // loop_footer_branch
      %15 = sbr.rel target = $region3
    $region8: #{tpu_custom_call.1} parent=1 // loop_exit
      _
    %779 = vsyncpa [#allocation3], 1
    %s780 = scalar_lea.sflag [#allocation3], 1
    %781 = vsyncpa %s780, 1
    %782 = vsyncpa [#allocation6], 1
    %783 = vsyncpa [#allocation4], 1
    %s784 = scalar_lea.sflag [#allocation4], 1
    %785 = vsyncpa %s784, 1

// kernel: tpu_custom_call.1
$region0: #{tpu_custom_call.1}
  #allocation0 [shape = 'u32[]', space=smem, size = 0x4, offset = 0x4, fixed_abs, tag = 'smem constant byte address 0x4 - core index']
  #allocation1 [shape = 'u32[144,128]{1,0:T(1,128)}', space=vmem, size = 0x12000, scoped, tag = 'internal scratch']
  %s0 = inlined_call_operand.hbm [shape: f32[32,128], index: 0, kind: input, shape index: {}]
  %s1 = inlined_call_operand.hbm [shape: bf16[640,128], index: 1, kind: input, shape index: {}]
  %s2 = inlined_call_operand.vmem [shape: f32[1,128], index: 2, kind: input, shape index: {}]
  %s3 = inlined_call_operand.hbm [shape: f32[32,128], index: 3, kind: output, shape index: {}]
  %s4 = sld [smem:[#allocation0]]
  $region53: #{tpu_custom_call.1} parent=0
    _
  %s6 = ssub.s32 1, %s4
  %s7 = scalar_select 0, %s6, %s4
  $region1: #{tpu_custom_call.1} parent=0
    #allocation2 [shape = 'u8[16384]{0}', space=vmem, size = 0x4000, scoped, tag = 'input window, operand 0']
    #allocation3 [shape = 's32[2]{0}', space=sflag, size = 0x8, scoped, tag = 'scoped memory for tpu_custom_call.1']
    #allocation4 [shape = 's32[2]{0}', space=sflag, size = 0x8, scoped, tag = 'scoped memory for tpu_custom_call.1']
    #allocation5 [shape = 'u8[163840]{0}', space=vmem, size = 0x28000, scoped, tag = 'input window, operand 1, single buffered']
    #allocation6 [shape = 's32[1]{0}', space=sflag, size = 0x4, scoped, tag = 'scoped memory for tpu_custom_call.1']
    #allocation7 [shape = 'u8[16384]{0}', space=vmem, size = 0x4000, scoped, tag = 'output window, operand 0']
    %8 = vsyncpa [#allocation3], 0
    %s9 = scalar_lea.sflag [#allocation3], 1
    %10 = vsyncpa %s9, 0
    %11 = vsyncpa [#allocation6], 0
    %12 = vsyncpa [#allocation4], 0
    %s13 = scalar_lea.sflag [#allocation4], 1
    %14 = vsyncpa %s13, 0
    loop: start=0, step=1, limit=4
    $region2: #{tpu_custom_call.1} parent=1 // loop_pre_header
      _
    $region3: #{tpu_custom_call.1} parent=1 // loop_header
      %s16 = sphi 0, %s20
      %p17 = scmp.ge.s32.totalorder %s16, 4
      %s23 = sphi 0, %s35
      %s24 = sphi 0, %s31
      %s25 = sphi 0, %s23
      %s26 = sphi 0, %s24
      %s27 = sphi 0, %s25
      %s28 = sphi 0, %s26
      %s38 = sphi 0, %s40
      %s41 = sphi 0, %s38
      %s42 = sphi 0, %s41
      %s58 = sphi 0, %s42
      %s64 = sphi 0, %s66
      %s67 = sphi 0, %s64
      %s68 = sphi 0, %s67
      %s84 = sphi 0, %s68
      %s90 = sphi 0, %s92
      %s93 = sphi 0, %s90
      %s94 = sphi 0, %s93
      %s110 = sphi 0, %s94
      %s118 = sphi 0, %s120
      %s121 = sphi 0, %s118
      %s122 = sphi 0, %s121
      %s138 = sphi 0, %s122
    $region4: #{tpu_custom_call.1} parent=1 // loop_header_branch
      %19 = sbr.rel (%p17) target = $region8
    $region5: #{tpu_custom_call.1} parent=1 // loop_body
      %s21 = ssub.s32 %s16, 1
      %s22 = ssub.s32 %s16, 2
      %s29 = sadd.s32 1, %s24
      %p30 = scmp.ge.s32.totalorder %s29, 1
      %s31 = scalar_select %p30, 0, %s29
      %s32 = sadd.s32 1, %s23
      %s33 = scalar_select %p30, %s32, %s23
      %p34 = scmp.ge.s32.totalorder %s33, 2
      %s35 = scalar_select %p34, 0, %s33
      %s36 = ssub.s32 %s23, %s35
      %p37 = scmp.eq.s32.totalorder %s36, 0
      %s39 = sadd.s32 %s38, 1
      %s40 = scalar_select %p37, %s38, %s39
      %p43 = pneg %p37
      %p44 = scmp.eq.s32.totalorder %s16, 1
      %p45 = por %p43, %p44
      %p46 = scmp.ne.s32.totalorder %s38, %s41
      %p47 = scmp.eq.s32.totalorder %s16, 0
      %p48 = por %p46, %p47
      %p49 = scmp.ne.s32.totalorder %s38, %s41
      %p50 = scmp.eq.s32.totalorder %s21, 1
      %p51 = por %p49, %p50
      %p52 = scmp.ne.s32.totalorder %s41, %s42
      %p53 = scmp.eq.s32.totalorder %s21, 0
      %p54 = por %p52, %p53
      %p55 = scmp.ne.s32.totalorder %s41, %s42
      %p56 = scmp.eq.s32.totalorder %s22, 1
      %p57 = por %p55, %p56
      %p59 = scmp.ne.s32.totalorder %s42, %s58
      %p60 = scmp.eq.s32.totalorder %s22, 0
      %p61 = por %p59, %p60
      %s62 = ssub.s32 %s24, %s31
      %p63 = scmp.eq.s32.totalorder %s62, 0
      %s65 = sadd.s32 %s64, 1
      %s66 = scalar_select %p63, %s64, %s65
      %p69 = pneg %p63
      %p70 = scmp.eq.s32.totalorder %s16, 1
      %p71 = por %p69, %p70
      %p72 = scmp.ne.s32.totalorder %s64, %s67
      %p73 = scmp.eq.s32.totalorder %s16, 0
      %p74 = por %p72, %p73
      %p75 = scmp.ne.s32.totalorder %s64, %s67
      %p76 = scmp.eq.s32.totalorder %s21, 1
      %p77 = por %p75, %p76
      %p78 = scmp.ne.s32.totalorder %s67, %s68
      %p79 = scmp.eq.s32.totalorder %s21, 0
      %p80 = por %p78, %p79
      %p81 = scmp.ne.s32.totalorder %s67, %s68
      %p82 = scmp.eq.s32.totalorder %s22, 1
      %p83 = por %p81, %p82
      %p85 = scmp.ne.s32.totalorder %s68, %s84
      %p86 = scmp.eq.s32.totalorder %s22, 0
      %p87 = por %p85, %p86
      %s88 = ssub.s32 %s24, %s31
      %p89 = scmp.eq.s32.totalorder %s88, 0
      %s91 = sadd.s32 %s90, 1
      %s92 = scalar_select %p89, %s90, %s91
      %p95 = pneg %p89
      %p96 = scmp.eq.s32.totalorder %s16, 1
      %p97 = por %p95, %p96
      %p98 = scmp.ne.s32.totalorder %s90, %s93
      %p99 = scmp.eq.s32.totalorder %s16, 0
      %p100 = por %p98, %p99
      %p101 = scmp.ne.s32.totalorder %s90, %s93
      %p102 = scmp.eq.s32.totalorder %s21, 1
      %p103 = por %p101, %p102
      %p104 = scmp.ne.s32.totalorder %s93, %s94
      %p105 = scmp.eq.s32.totalorder %s21, 0
      %p106 = por %p104, %p105
      %p107 = scmp.ne.s32.totalorder %s93, %s94
      %p108 = scmp.eq.s32.totalorder %s22, 1
      %p109 = por %p107, %p108
      %p111 = scmp.ne.s32.totalorder %s94, %s110
      %p112 = scmp.eq.s32.totalorder %s22, 0
      %p113 = por %p111, %p112
      %s114 = ssub.s32 %s23, %s35
      %s115 = ssub.s32 %s24, %s31
      %s116 = sor.u32 %s114, %s115
      %p117 = scmp.eq.s32.totalorder %s116, 0
      %s119 = sadd.s32 %s118, 1
      %s120 = scalar_select %p117, %s118, %s119
      %p123 = pneg %p117
      %p124 = scmp.eq.s32.totalorder %s16, 1
      %p125 = por %p123, %p124
      %p126 = scmp.ne.s32.totalorder %s118, %s121
      %p127 = scmp.eq.s32.totalorder %s16, 0
      %p128 = por %p126, %p127
      %p129 = scmp.ne.s32.totalorder %s118, %s121
      %p130 = scmp.eq.s32.totalorder %s21, 1
      %p131 = por %p129, %p130
      %p132 = scmp.ne.s32.totalorder %s121, %s122
      %p133 = scmp.eq.s32.totalorder %s21, 0
      %p134 = por %p132, %p133
      %p135 = scmp.ne.s32.totalorder %s121, %s122
      %p136 = scmp.eq.s32.totalorder %s22, 1
      %p137 = por %p135, %p136
      %p139 = scmp.ne.s32.totalorder %s122, %s138
      %p140 = scmp.eq.s32.totalorder %s22, 0
      %p141 = por %p139, %p140
      %p142 = scmp.le.s32.totalorder 1, %s16
      %p143 = scmp.lt.s32.totalorder %s16, 3
      %p144 = pnand %p142, %p143
      %p145 = pneg %p144
      // Predicated region
      $region9: #{tpu_custom_call.1} parent=5 // pred_check
        _
      $region10: #{tpu_custom_call.1} parent=5 // pred_check_branch
        %147 = sbr.rel (%p144) target = $region12
      $region11: #{tpu_custom_call.1} parent=5 // pred_region
        %s148 = ssub.s32 %s16, 1
        // Predicated region
        $region13: #{tpu_custom_call.1} parent=11 // pred_check
          %p149 = pneg %p80
        $region14: #{tpu_custom_call.1} parent=11 // pred_check_branch
          %151 = sbr.rel (%p149) target = $region16
        $region15: #{tpu_custom_call.1} parent=11 // pred_region
          %s153 = ssub.s32 5120, 5120
          %154 = vsyncadd [#allocation6], %s153
          %s155 = smul.addr %s26, 64
          %s156 = scalar_lea.hbm %s1, %s155
          %s157 = sshll.u32 [#allocation5], 4
          %s158 = int_to_ptr.vmem [resolvable:$true] %s157
          %163 = dma.hbm_to_vmem [thread:$0]  %s156, 5120, %s158, [#allocation6], 64, 64, 4
        $region16: #{tpu_custom_call.1} parent=11 // pred_fallthru
          _
        // Predicated region
        $region17: #{tpu_custom_call.1} parent=11 // pred_check
          %p164 = pneg %p106
        $region18: #{tpu_custom_call.1} parent=11 // pred_check_branch
          %166 = sbr.rel (%p164) target = $region20
        $region19: #{tpu_custom_call.1} parent=11 // pred_region
          %p167 = scmp.lt.s32.totalorder %s26, 0
          %s168 = scalar_select %p167, %s26, 0
          %s169 = scalar_lea.vmem %s2, %s168
        $region20: #{tpu_custom_call.1} parent=11 // pred_fallthru
          _
      $region12: #{tpu_custom_call.1} parent=5 // pred_fallthru
        _
      %p170 = scmp.lt.s32.totalorder %s16, 2
      // Predicated region
      $region21: #{tpu_custom_call.1} parent=5 // pred_check
        %p171 = pneg %p170
      $region22: #{tpu_custom_call.1} parent=5 // pred_check_branch
        %173 = sbr.rel (%p171) target = $region24
      $region23: #{tpu_custom_call.1} parent=5 // pred_region
        // Predicated region
        $region25: #{tpu_custom_call.1} parent=23 // pred_check
          %p174 = pneg %p48
        $region26: #{tpu_custom_call.1} parent=23 // pred_check_branch
          %176 = sbr.rel (%p174) target = $region28
        $region27: #{tpu_custom_call.1} parent=23 // pred_region
          %s177 = sand.u32 %s38, 1
          %s178 = scalar_lea.sflag [#allocation3], %s177
          %s179 = sand.u32 %s38, 1
          %s180 = smul.addr %s179, 16
          %s181 = scalar_lea.vmem [#allocation2], %s180
          %s182 = smul.u32 2, %s23
          %s184 = ssub.s32 256, 256
          %185 = vsyncadd %s178, %s184
          %s186 = smul.addr %s182, 128
          %s187 = scalar_lea.hbm %s0, %s186
          %s188 = sshll.u32 %s181, 4
          %s189 = int_to_ptr.vmem [resolvable:$true] %s188
          %194 = dma.hbm_to_vmem [thread:$0]  %s187, 256, %s189, %s178, 128, 128, 8
        $region28: #{tpu_custom_call.1} parent=23 // pred_fallthru
          _
      $region24: #{tpu_custom_call.1} parent=5 // pred_fallthru
        _
      %p195 = scmp.le.s32.totalorder 1, %s16
      %p196 = scmp.lt.s32.totalorder %s16, 3
      %p197 = pnand %p195, %p196
      %p198 = pneg %p197
      // Predicated region
      $region29: #{tpu_custom_call.1} parent=5 // pred_check
        _
      $region30: #{tpu_custom_call.1} parent=5 // pred_check_branch
        %200 = sbr.rel (%p197) target = $region32
      $region31: #{tpu_custom_call.1} parent=5 // pred_region
        %s201 = ssub.s32 %s16, 1
        %s202 = sand.u32 %s41, 1
        %s203 = scalar_lea.sflag [#allocation3], %s202
        %s204 = sand.u32 %s41, 1
        %s205 = smul.addr %s204, 16
        %s206 = scalar_lea.vmem [#allocation2], %s205
        // Predicated region
        $region33: #{tpu_custom_call.1} parent=31 // pred_check
          %p207 = pneg %p54
        $region34: #{tpu_custom_call.1} parent=31 // pred_check_branch
          %209 = sbr.rel (%p207) target = $region36
        $region35: #{tpu_custom_call.1} parent=31 // pred_region
          %210 = dma.done %s203, 256
        $region36: #{tpu_custom_call.1} parent=31 // pred_fallthru
          _
        // Predicated region
        $region37: #{tpu_custom_call.1} parent=31 // pred_check
          %p211 = pneg %p80
        $region38: #{tpu_custom_call.1} parent=31 // pred_check_branch
          %213 = sbr.rel (%p211) target = $region40
        $region39: #{tpu_custom_call.1} parent=31 // pred_region
          %214 = dma.done [#allocation6], 5120
        $region40: #{tpu_custom_call.1} parent=31 // pred_fallthru
          _
        %s215 = sand.u32 %s41, 1
        %s216 = scalar_lea.sflag [#allocation3], %s215
        %s217 = sand.u32 %s41, 1
        %s218 = smul.addr %s217, 16
        %s219 = scalar_lea.vmem [#allocation2], %s218
        %p220 = pneg %p54
        %p221 = pneg %p51
        %p222 = pneg %p80
        %p223 = pneg %p77
        %p224 = scmp.lt.s32.totalorder %s26, 0
        %s225 = scalar_select %p224, %s26, 0
        %s226 = scalar_lea.vmem %s2, %s225
        %p227 = pneg %p106
        %p228 = pneg %p103
        %p229 = pneg %p134
        %p230 = pneg %p131
        %s231 = sand.u32 %s121, 1
        %s232 = scalar_lea.sflag [#allocation4], %s231
        %s233 = sand.u32 %s121, 1
        %s234 = smul.addr %s233, 16
        %s235 = scalar_lea.vmem [#allocation7], %s234
        %s236 = smul.u32 2, %s25
        %p237 = scmp.lt.s32.totalorder %s26, 0
        %s238 = scalar_select %p237, %s26, 0
        %s239 = scalar_lea.vmem %s2, %s238
        %s240 = smul.u32 2, %s25
        %v242 = vld [vmem:[%s206] sm:$0xff]
        %v243 = vld [vmem:[%s206 + $0x8] sm:$0xff]
        %v244 = vxor.u32 %v242, 2147483648
        %v245 = vxor.u32 %v243, 2147483648
        %v246 = vmul.f32 %v244, 1.442695
        %v247 = vpow.pop %v246
        %v248 = vmul.f32 %v245, 1.442695
        %v249 = vpow.pop %v248
        %v250 = vadd.f32 %v247, 1.0
        %v251 = vadd.f32 %v249, 1.0
        %v252 = vrcp.pop %v250
        %v253 = vmul.f32 1.0, %v252
        %v254 = vrcp.pop %v251
        %v255 = vmul.f32 1.0, %v254
        %v256 = vmul.f32 %v253, %v253
        %v257 = vmul.f32 %v255, %v255
        %v258 = vmul.f32 %v253, %v256
        %v259 = vmul.f32 %v255, %v257
        %v260 = vadd.f32 %v258, 1.0
        %v261 = vadd.f32 %v259, 1.0
        %v262 = vadd.f32 %v260, %v253
        %v263 = vadd.f32 %v261, %v255
        %v264 = vadd.f32 %v262, %v253
        %v265 = vadd.f32 %v263, %v255
        %v266 = vmul.f32 %v253, %v264
        %v267 = vmul.f32 %v255, %v265
        %v268 = vadd.f32 %v266, 1.0
        %v269 = vadd.f32 %v267, 1.0
        %v270 = vadd.f32 %v268, %v253
        %v271 = vadd.f32 %v269, %v255
        %v272 = vadd.f32 %v270, %v253
        %v273 = vadd.f32 %v271, %v255
        %v274 = vadd.f32 %v272, %v256
        %v275 = vadd.f32 %v273, %v257
        %v276 = vmul.f32 %v253, %v274
        %v277 = vmul.f32 %v255, %v275
        %v278 = vadd.f32 %v276, %v253
        %v279 = vadd.f32 %v277, %v255
        %v280 = vadd.f32 %v278, %v253
        %v281 = vadd.f32 %v279, %v255
        %v282 = vadd.f32 %v280, %v256
        %v283 = vadd.f32 %v281, %v257
        %v284 = vadd.f32 %v282, %v264
        %v285 = vadd.f32 %v283, %v265
        %v286 = vpack.c.bf16 %v255, %v253
        %v287 = vpack.c.bf16 %v257, %v256
        %v288 = vpack.c.bf16 %v265, %v264
        %v289 = vpack.c.bf16 %v275, %v274
        %v290 = vpack.c.bf16 %v285, %v284
        %v291 = vld [vmem:[#allocation5] sm:$0xf]
        %v292 = vld [vmem:[#allocation5 + $0x4] sm:$0xf]
        %v293 = vld [vmem:[#allocation5 + $0x8] sm:$0xf]
        %v294 = vld [vmem:[#allocation5 + $0xc] sm:$0xf]
        %v295 = vld [vmem:[#allocation5 + $0x10] sm:$0xf]
        %v296 = vld [vmem:[#allocation5 + $0x14] sm:$0xf]
        %v297 = vld [vmem:[#allocation5 + $0x18] sm:$0xf]
        %v298 = vld [vmem:[#allocation5 + $0x1c] sm:$0xf]
        %v299 = vld [vmem:[#allocation5 + $0x20] sm:$0xf]
        %v300 = vld [vmem:[#allocation5 + $0x24] sm:$0xf]
        %v301 = vld [vmem:[#allocation5 + $0x28] sm:$0xf]
        %v302 = vld [vmem:[#allocation5 + $0x2c] sm:$0xf]
        %v303 = vld [vmem:[#allocation5 + $0x30] sm:$0xf]
        %v304 = vld [vmem:[#allocation5 + $0x34] sm:$0xf]
        %v305 = vld [vmem:[#allocation5 + $0x38] sm:$0xf]
        %v306 = vld [vmem:[#allocation5 + $0x3c] sm:$0xf]
        %v307 = vld [vmem:[#allocation5 + $0x40] sm:$0xf]
        %v308 = vld [vmem:[#allocation5 + $0x44] sm:$0xf]
        %v309 = vld [vmem:[#allocation5 + $0x48] sm:$0xf]
        %v310 = vld [vmem:[#allocation5 + $0x4c] sm:$0xf]
        %v311 = vld [vmem:[#allocation5 + $0x50] sm:$0xf]
        %v312 = vld [vmem:[#allocation5 + $0x54] sm:$0xf]
        %v313 = vld [vmem:[#allocation5 + $0x58] sm:$0xf]
        %v314 = vld [vmem:[#allocation5 + $0x5c] sm:$0xf]
        %v315 = vld [vmem:[#allocation5 + $0x60] sm:$0xf]
        %v316 = vld [vmem:[#allocation5 + $0x64] sm:$0xf]
        %v317 = vld [vmem:[#allocation5 + $0x68] sm:$0xf]
        %v318 = vld [vmem:[#allocation5 + $0x6c] sm:$0xf]
        %v319 = vld [vmem:[#allocation5 + $0x70] sm:$0xf]
        %v320 = vld [vmem:[#allocation5 + $0x74] sm:$0xf]
        %v321 = vld [vmem:[#allocation5 + $0x78] sm:$0xf]
        %v322 = vld [vmem:[#allocation5 + $0x7c] sm:$0xf]
        %v323 = vld [vmem:[#allocation5 + $0x80] sm:$0xf]
        %v324 = vld [vmem:[#allocation5 + $0x84] sm:$0xf]
        %v325 = vld [vmem:[#allocation5 + $0x88] sm:$0xf]
        %v326 = vld [vmem:[#allocation5 + $0x8c] sm:$0xf]
        %v327 = vld [vmem:[#allocation5 + $0x90] sm:$0xf]
        %v328 = vld [vmem:[#allocation5 + $0x94] sm:$0xf]
        %v329 = vld [vmem:[#allocation5 + $0x98] sm:$0xf]
        %v330 = vld [vmem:[#allocation5 + $0x9c] sm:$0xf]
        %v331 = vld [vmem:[#allocation5 + $0xa0] sm:$0xf]
        %v332 = vld [vmem:[#allocation5 + $0xa4] sm:$0xf]
        %v333 = vld [vmem:[#allocation5 + $0xa8] sm:$0xf]
        %v334 = vld [vmem:[#allocation5 + $0xac] sm:$0xf]
        %v335 = vld [vmem:[#allocation5 + $0xb0] sm:$0xf]
        %v336 = vld [vmem:[#allocation5 + $0xb4] sm:$0xf]
        %v337 = vld [vmem:[#allocation5 + $0xb8] sm:$0xf]
        %v338 = vld [vmem:[#allocation5 + $0xbc] sm:$0xf]
        %v339 = vld [vmem:[#allocation5 + $0xc0] sm:$0xf]
        %v340 = vld [vmem:[#allocation5 + $0xc4] sm:$0xf]
        %v341 = vld [vmem:[#allocation5 + $0xc8] sm:$0xf]
        %v342 = vld [vmem:[#allocation5 + $0xcc] sm:$0xf]
        %v343 = vld [vmem:[#allocation5 + $0xd0] sm:$0xf]
        %v344 = vld [vmem:[#allocation5 + $0xd4] sm:$0xf]
        %v345 = vld [vmem:[#allocation5 + $0xd8] sm:$0xf]
        %v346 = vld [vmem:[#allocation5 + $0xdc] sm:$0xf]
        %v347 = vld [vmem:[#allocation5 + $0xe0] sm:$0xf]
        %v348 = vld [vmem:[#allocation5 + $0xe4] sm:$0xf]
        %v349 = vld [vmem:[#allocation5 + $0xe8] sm:$0xf]
        %v350 = vld [vmem:[#allocation5 + $0xec] sm:$0xf]
        %v351 = vld [vmem:[#allocation5 + $0xf0] sm:$0xf]
        %v352 = vld [vmem:[#allocation5 + $0xf4] sm:$0xf]
        %v353 = vld [vmem:[#allocation5 + $0xf8] sm:$0xf]
        %v354 = vld [vmem:[#allocation5 + $0xfc] sm:$0xf]
        %v355 = vld [vmem:[#allocation5 + $0x100] sm:$0xf]
        %v356 = vld [vmem:[#allocation5 + $0x104] sm:$0xf]
        %v357 = vld [vmem:[#allocation5 + $0x108] sm:$0xf]
        %v358 = vld [vmem:[#allocation5 + $0x10c] sm:$0xf]
        %v359 = vld [vmem:[#allocation5 + $0x110] sm:$0xf]
        %v360 = vld [vmem:[#allocation5 + $0x114] sm:$0xf]
        %v361 = vld [vmem:[#allocation5 + $0x118] sm:$0xf]
        %v362 = vld [vmem:[#allocation5 + $0x11c] sm:$0xf]
        %v363 = vld [vmem:[#allocation5 + $0x120] sm:$0xf]
        %v364 = vld [vmem:[#allocation5 + $0x124] sm:$0xf]
        %v365 = vld [vmem:[#allocation5 + $0x128] sm:$0xf]
        %v366 = vld [vmem:[#allocation5 + $0x12c] sm:$0xf]
        %v367 = vld [vmem:[#allocation5 + $0x130] sm:$0xf]
        %v368 = vld [vmem:[#allocation5 + $0x134] sm:$0xf]
        %v369 = vld [vmem:[#allocation5 + $0x138] sm:$0xf]
        %v370 = vld [vmem:[#allocation5 + $0x13c] sm:$0xf]
        %v371 = vld [vmem:[%s239] sm:$0x1]
        %v373 = vlaneseq
        %v374 = vshrl.u32 %v373, 7
        %v375 = vsub.s32 0, %v374
        %v376 = vrot.slane %v371, %v375
        %v458 = vunpack.c.l.b16 %v291
        %v459 = vunpack.c.l.b16 %v292
        %v460 = vunpack.c.l.b16 %v293
        %v461 = vunpack.c.l.b16 %v294
        %v462 = vunpack.c.l.b16 %v295
        %v463 = vunpack.c.l.b16 %v296
        %v464 = vunpack.c.l.b16 %v297
        %v465 = vunpack.c.l.b16 %v298
        %v466 = vunpack.c.l.b16 %v299
        %v467 = vunpack.c.l.b16 %v300
        %v468 = vunpack.c.l.b16 %v301
        %v469 = vunpack.c.l.b16 %v302
        %v470 = vunpack.c.l.b16 %v303
        %v471 = vunpack.c.l.b16 %v304
        %v472 = vunpack.c.l.b16 %v305
        %v473 = vunpack.c.l.b16 %v306
        %v474 = vunpack.c.l.b16 %v307
        %v475 = vunpack.c.l.b16 %v308
        %v476 = vunpack.c.l.b16 %v309
        %v477 = vunpack.c.l.b16 %v310
        %v478 = vunpack.c.l.b16 %v311
        %v479 = vunpack.c.l.b16 %v312
        %v480 = vunpack.c.l.b16 %v313
        %v481 = vunpack.c.l.b16 %v314
        %v482 = vunpack.c.l.b16 %v315
        %v483 = vunpack.c.l.b16 %v316
        %v484 = vunpack.c.l.b16 %v317
        %v485 = vunpack.c.l.b16 %v318
        %v486 = vunpack.c.l.b16 %v319
        %v487 = vunpack.c.l.b16 %v320
        %v488 = vunpack.c.l.b16 %v321
        %v489 = vunpack.c.l.b16 %v322
        %v490 = vunpack.c.l.b16 %v323
        %v491 = vunpack.c.l.b16 %v324
        %v492 = vunpack.c.l.b16 %v325
        %v493 = vunpack.c.l.b16 %v326
        %v494 = vunpack.c.l.b16 %v327
        %v495 = vunpack.c.l.b16 %v328
        %v496 = vunpack.c.l.b16 %v329
        %v497 = vunpack.c.l.b16 %v330
        %v498 = vunpack.c.l.b16 %v331
        %v499 = vunpack.c.l.b16 %v332
        %v500 = vunpack.c.l.b16 %v333
        %v501 = vunpack.c.l.b16 %v334
        %v502 = vunpack.c.l.b16 %v335
        %v503 = vunpack.c.l.b16 %v336
        %v504 = vunpack.c.l.b16 %v337
        %v505 = vunpack.c.l.b16 %v338
        %v506 = vunpack.c.l.b16 %v339
        %v507 = vunpack.c.l.b16 %v340
        %v508 = vunpack.c.l.b16 %v341
        %v509 = vunpack.c.l.b16 %v342
        %v510 = vunpack.c.l.b16 %v343
        %v511 = vunpack.c.l.b16 %v344
        %v512 = vunpack.c.l.b16 %v345
        %v513 = vunpack.c.l.b16 %v346
        %v514 = vunpack.c.l.b16 %v347
        %v515 = vunpack.c.l.b16 %v348
        %v516 = vunpack.c.l.b16 %v349
        %v517 = vunpack.c.l.b16 %v350
        %v518 = vunpack.c.l.b16 %v351
        %v519 = vunpack.c.l.b16 %v352
        %v520 = vunpack.c.l.b16 %v353
        %v521 = vunpack.c.l.b16 %v354
        %v522 = vunpack.c.l.b16 %v355
        %v523 = vunpack.c.l.b16 %v356
        %v524 = vunpack.c.l.b16 %v357
        %v525 = vunpack.c.l.b16 %v358
        %v526 = vunpack.c.l.b16 %v359
        %v527 = vunpack.c.l.b16 %v360
        %v528 = vunpack.c.l.b16 %v361
        %v529 = vunpack.c.l.b16 %v362
        %v530 = vunpack.c.l.b16 %v363
        %v531 = vunpack.c.l.b16 %v364
        %v532 = vunpack.c.l.b16 %v365
        %v533 = vunpack.c.l.b16 %v366
        %v534 = vunpack.c.l.b16 %v367
        %v535 = vunpack.c.l.b16 %v368
        %v536 = vunpack.c.l.b16 %v369
        %v537 = vunpack.c.l.b16 %v370
        %v538 = vpack.c.b16 %v459, %v458
        %v539 = vpack.c.b16 %v461, %v460
        %v540 = vpack.c.b16 %v463, %v462
        %v541 = vpack.c.b16 %v465, %v464
        %v542 = vpack.c.b16 %v467, %v466
        %v543 = vpack.c.b16 %v469, %v468
        %v544 = vpack.c.b16 %v471, %v470
        %v545 = vpack.c.b16 %v473, %v472
        %v546 = vpack.c.b16 %v475, %v474
        %v547 = vpack.c.b16 %v477, %v476
        %v548 = vpack.c.b16 %v479, %v478
        %v549 = vpack.c.b16 %v481, %v480
        %v550 = vpack.c.b16 %v483, %v482
        %v551 = vpack.c.b16 %v485, %v484
        %v552 = vpack.c.b16 %v487, %v486
        %v553 = vpack.c.b16 %v489, %v488
        %v554 = vpack.c.b16 %v491, %v490
        %v555 = vpack.c.b16 %v493, %v492
        %v556 = vpack.c.b16 %v495, %v494
        %v557 = vpack.c.b16 %v497, %v496
        %v558 = vpack.c.b16 %v499, %v498
        %v559 = vpack.c.b16 %v501, %v500
        %v560 = vpack.c.b16 %v503, %v502
        %v561 = vpack.c.b16 %v505, %v504
        %v562 = vpack.c.b16 %v507, %v506
        %v563 = vpack.c.b16 %v509, %v508
        %v564 = vpack.c.b16 %v511, %v510
        %v565 = vpack.c.b16 %v513, %v512
        %v566 = vpack.c.b16 %v515, %v514
        %v567 = vpack.c.b16 %v517, %v516
        %v568 = vpack.c.b16 %v519, %v518
        %v569 = vpack.c.b16 %v521, %v520
        %v570 = vpack.c.b16 %v523, %v522
        %v571 = vpack.c.b16 %v525, %v524
        %v572 = vpack.c.b16 %v527, %v526
        %v573 = vpack.c.b16 %v529, %v528
        %v574 = vpack.c.b16 %v531, %v530
        %v575 = vpack.c.b16 %v533, %v532
        %v576 = vpack.c.b16 %v535, %v534
        %v577 = vpack.c.b16 %v537, %v536
        %618 = vmatprep.subr.bf16.mxu0 0
        %619 = vmatpush1.bf16.msra.mxu0 %v538
        %620 = vmatprep.subr.bf16.mxu0 0
        %621 = vmatpush1.bf16.msra.mxu0 %v539
        %622 = vmatprep.subr.bf16.mxu0 0
        %623 = vmatpush1.bf16.msra.mxu0 %v540
        %624 = vmatprep.subr.bf16.mxu0 0
        %625 = vmatpush1.bf16.msra.mxu0 %v541
        %626 = vmatprep.subr.bf16.mxu0 0
        %627 = vmatpush1.bf16.msra.mxu0 %v542
        %628 = vmatprep.subr.bf16.mxu0 0
        %629 = vmatpush1.bf16.msra.mxu0 %v543
        %630 = vmatprep.subr.bf16.mxu0 0
        %631 = vmatpush1.bf16.msra.mxu0 %v544
        %632 = vmatprep.subr.bf16.mxu0 0
        %633 = vmatpush1.bf16.msra.mxu0 %v545
        %634 = vmatprep.subr.bf16.mxu0 0
        %635 = vmatpush1.bf16.msra.mxu0 %v546
        %636 = vmatprep.subr.bf16.mxu0 0
        %637 = vmatpush1.bf16.msra.mxu0 %v547
        %638 = vmatprep.subr.bf16.mxu0 0
        %639 = vmatpush1.bf16.msra.mxu0 %v548
        %640 = vmatprep.subr.bf16.mxu0 0
        %641 = vmatpush1.bf16.msra.mxu0 %v549
        %642 = vmatprep.subr.bf16.mxu0 0
        %643 = vmatpush1.bf16.msra.mxu0 %v550
        %644 = vmatprep.subr.bf16.mxu0 0
        %645 = vmatpush1.bf16.msra.mxu0 %v551
        %646 = vmatprep.subr.bf16.mxu0 0
        %647 = vmatpush1.bf16.msra.mxu0 %v552
        %648 = vmatprep.subr.bf16.mxu0 0
        %649 = vmatpush1.bf16.msra.mxu0 %v553
        %650 = vmatprep.mubr.bf16.mxu0 %v287
        %651 = vmatmul.mubr.bf16.gmra.mrb[0].mxu0 %v286
        %v652 = vpop.f32.mrb[0].mxu0
        %v653 = vadd.f32 %v376, %v652
        %v654 = vpop.f32.mrb[0].mxu0
        %v655 = vpop.f32.mrb[0].mxu0
        %v656 = vadd.f32 %v376, %v655
        %v657 = vpop.f32.mrb[0].mxu0
        %658 = vdwg.mxu0
        %659 = vmatprep.subr.bf16.mxu0 0
        %660 = vmatpush1.bf16.msra.mxu0 %v554
        %661 = vmatprep.subr.bf16.mxu0 0
        %662 = vmatpush1.bf16.msra.mxu0 %v555
        %663 = vmatprep.subr.bf16.mxu0 0
        %664 = vmatpush1.bf16.msra.mxu0 %v556
        %665 = vmatprep.subr.bf16.mxu0 0
        %666 = vmatpush1.bf16.msra.mxu0 %v557
        %667 = vmatprep.subr.bf16.mxu0 0
        %668 = vmatpush1.bf16.msra.mxu0 %v558
        %669 = vmatprep.subr.bf16.mxu0 0
        %670 = vmatpush1.bf16.msra.mxu0 %v559
        %671 = vmatprep.subr.bf16.mxu0 0
        %672 = vmatpush1.bf16.msra.mxu0 %v560
        %673 = vmatprep.subr.bf16.mxu0 0
        %674 = vmatpush1.bf16.msra.mxu0 %v561
        %675 = vmatprep.subr.bf16.mxu0 0
        %676 = vmatpush1.bf16.msra.mxu0 %v562
        %677 = vmatprep.subr.bf16.mxu0 0
        %678 = vmatpush1.bf16.msra.mxu0 %v563
        %679 = vmatprep.subr.bf16.mxu0 0
        %680 = vmatpush1.bf16.msra.mxu0 %v564
        %681 = vmatprep.subr.bf16.mxu0 0
        %682 = vmatpush1.bf16.msra.mxu0 %v565
        %683 = vmatprep.subr.bf16.mxu0 0
        %684 = vmatpush1.bf16.msra.mxu0 %v566
        %685 = vmatprep.subr.bf16.mxu0 0
        %686 = vmatpush1.bf16.msra.mxu0 %v567
        %687 = vmatprep.subr.bf16.mxu0 0
        %688 = vmatpush1.bf16.msra.mxu0 %v568
        %689 = vmatprep.subr.bf16.mxu0 0
        %690 = vmatpush1.bf16.msra.mxu0 %v569
        %691 = vmatprep.mubr.bf16.mxu0 %v289
        %692 = vmatmul.mubr.bf16.gmra.mrb[0].mxu0 %v288
        %v693 = vpop.f32.mrb[0].mxu0
        %v694 = vadd.f32 %v653, %v693
        %v695 = vpop.f32.mrb[0].mxu0
        %v696 = vpop.f32.mrb[0].mxu0
        %v697 = vadd.f32 %v656, %v696
        %v698 = vpop.f32.mrb[0].mxu0
        %699 = vdwg.mxu0
        %700 = vmatprep.subr.bf16.mxu0 0
        %701 = vmatpush1.bf16.msra.mxu0 %v570
        %702 = vmatprep.subr.bf16.mxu0 0
        %703 = vmatpush1.bf16.msra.mxu0 %v571
        %704 = vmatprep.subr.bf16.mxu0 0
        %705 = vmatpush1.bf16.msra.mxu0 %v572
        %706 = vmatprep.subr.bf16.mxu0 0
        %707 = vmatpush1.bf16.msra.mxu0 %v573
        %708 = vmatprep.subr.bf16.mxu0 0
        %709 = vmatpush1.bf16.msra.mxu0 %v574
        %710 = vmatprep.subr.bf16.mxu0 0
        %711 = vmatpush1.bf16.msra.mxu0 %v575
        %712 = vmatprep.subr.bf16.mxu0 0
        %713 = vmatpush1.bf16.msra.mxu0 %v576
        %714 = vmatprep.subr.bf16.mxu0 0
        %715 = vmatpush1.bf16.msra.mxu0 %v577
        %716 = vmatprep.subr.bf16.mxu0 0
        %717 = vmatpush1.bf16.msra.mxu0 0
        %718 = vmatprep.subr.bf16.mxu0 0
        %719 = vmatpush1.bf16.msra.mxu0 0
        %720 = vmatprep.subr.bf16.mxu0 0
        %721 = vmatpush1.bf16.msra.mxu0 0
        %722 = vmatprep.subr.bf16.mxu0 0
        %723 = vmatpush1.bf16.msra.mxu0 0
        %724 = vmatprep.subr.bf16.mxu0 0
        %725 = vmatpush1.bf16.msra.mxu0 0
        %726 = vmatprep.subr.bf16.mxu0 0
        %727 = vmatpush1.bf16.msra.mxu0 0
        %728 = vmatprep.subr.bf16.mxu0 0
        %729 = vmatpush1.bf16.msra.mxu0 0
        %730 = vmatprep.subr.bf16.mxu0 0
        %731 = vmatpush1.bf16.msra.mxu0 0
        %732 = vmatprep.mubr.bf16.mxu0 0
        %733 = vmatmul.mubr.bf16.gmra.mrb[0].mxu0 %v290
        %v734 = vpop.f32.mrb[0].mxu0
        %v735 = vadd.f32 %v694, %v734
        %v736 = vpop.f32.mrb[0].mxu0
        %v737 = vpop.f32.mrb[0].mxu0
        %v738 = vadd.f32 %v697, %v737
        %v739 = vpop.f32.mrb[0].mxu0
        %740 = vdwg.mxu0
        %741 = vst [vmem:[%s235] sm:$0xff] %v735
        %742 = vst [vmem:[%s235 + $0x8] sm:$0xff] %v738
        %s743 = sand.u32 %s121, 1
        %s744 = scalar_lea.sflag [#allocation4], %s743
        %s745 = sand.u32 %s121, 1
        %s746 = smul.addr %s745, 16
        %s747 = scalar_lea.vmem [#allocation7], %s746
        // Predicated region
        $region41: #{tpu_custom_call.1} parent=31 // pred_check
          %p748 = pneg %p131
        $region42: #{tpu_custom_call.1} parent=31 // pred_check_branch
          %750 = sbr.rel (%p748) target = $region44
        $region43: #{tpu_custom_call.1} parent=31 // pred_region
          %s751 = smul.u32 2, %s25
          %s753 = ssub.s32 256, 256
          %754 = vsyncadd %s744, %s753
          %s755 = sadd.s32 %s26, %s751
          %s756 = smul.addr %s755, 128
          %s757 = scalar_lea.hbm %s3, %s756
          %s758 = sshll.u32 %s747, 4
          %s759 = int_to_ptr.vmem [resolvable:$true] %s758
          %764 = dma.vmem_to_hbm [thread:$0]  %s759, 256, %s757, %s744, 128, 128, 8
        $region44: #{tpu_custom_call.1} parent=31 // pred_fallthru
          _
      $region32: #{tpu_custom_call.1} parent=5 // pred_fallthru
        _
      %p765 = scmp.le.s32.totalorder 2, %s16
      // Predicated region
      $region45: #{tpu_custom_call.1} parent=5 // pred_check
        %p766 = pneg %p765
      $region46: #{tpu_custom_call.1} parent=5 // pred_check_branch
        %768 = sbr.rel (%p766) target = $region48
      $region47: #{tpu_custom_call.1} parent=5 // pred_region
        %s769 = ssub.s32 %s16, 2
        // Predicated region
        $region49: #{tpu_custom_call.1} parent=47 // pred_check
          %p770 = pneg %p137
        $region50: #{tpu_custom_call.1} parent=47 // pred_check_branch
          %772 = sbr.rel (%p770) target = $region52
        $region51: #{tpu_custom_call.1} parent=47 // pred_region
          %s773 = sand.u32 %s122, 1
          %s774 = scalar_lea.sflag [#allocation4], %s773
          %s775 = sand.u32 %s122, 1
          %s776 = smul.addr %s775, 16
          %s777 = scalar_lea.vmem [#allocation7], %s776
          %778 = dma.done %s774, 256
        $region52: #{tpu_custom_call.1} parent=47 // pred_fallthru
          _
      $region48: #{tpu_custom_call.1} parent=5 // pred_fallthru
        _
    $region6: #{tpu_custom_call.1} parent=1 // loop_footer
      %s20 = sadd.s32 1, %s16
    $region7: #{tpu_custom_call.1} parent=1 // loop_footer_branch
      %15 = sbr.rel target = $region3
    $region8: #{tpu_custom_call.1} parent=1 // loop_exit
      _
    %779 = vsyncpa [#allocation3], 1
    %s780 = scalar_lea.sflag [#allocation3], 1
    %781 = vsyncpa %s780, 1
    %782 = vsyncpa [#allocation6], 1
    %783 = vsyncpa [#allocation4], 1
    %s784 = scalar_lea.sflag [#allocation4], 1
    %785 = vsyncpa %s784, 1

</llo_original>
